<compile_context>
chip_gen: v7x
topology: tpu7x:2x2x1
jax: 0.10.0
libtpu: 0.0.40
codegen_flags: <defaults>
</compile_context>

<pallas_src>
import functools

import jax
import jax.numpy as jnp
from jax.experimental import pallas as pl
from jax.experimental.pallas import tpu as pltpu

EPS = 1e-5
NEG_SLOPE = 0.01                 # PyTorch nn.LeakyReLU default negative_slope
MATMUL_DTYPE = jnp.bfloat16      # MXU operand dtype on all generations; accumulation is f32
LANE = 128


def _leaky(x):
    return jnp.where(x > 0, x, NEG_SLOPE * x)


def _pad_to_lane(n):
    return ((n + LANE - 1) // LANE) * LANE


# ----------------------------------------------------------------------------
# Fused kernel. Grid = (batch tiles [parallel], sequence tiles [arbitrary]).
# refs = conv params (6*num_blocks) + decoder params (4) + out_ref + acc scratch.
# ----------------------------------------------------------------------------
def _fused_kernel(num_blocks, ln_divisors, tb, tn, mask_ref, x_ref, *refs):
    conv_refs = refs[: 6 * num_blocks]
    dw1, db1, dw2, db2 = refs[6 * num_blocks: 6 * num_blocks + 4]
    out_ref = refs[6 * num_blocks + 4]
    acc_ref = refs[6 * num_blocks + 5]

    n_idx = pl.program_id(1)
    n_last = pl.num_programs(1) - 1

    c_in = x_ref.shape[-1]
    # flatten (tb, tn, C) -> (tb*tn, C); layout-preserving when tn % 8 == 0
    h = x_ref[...].reshape(tb * tn, c_in)

    for i in range(num_blocks):
        w1, b1, w2, b2, gamma, beta = conv_refs[6 * i: 6 * i + 6]
        # Conv1d(k=1) == per-position matmul (bf16 operands, f32 accumulation)
        h = jnp.dot(h.astype(MATMUL_DTYPE), w1[...],
                    preferred_element_type=jnp.float32) + b1[...]
        h = _leaky(h)
        h = jnp.dot(h.astype(MATMUL_DTYPE), w2[...],
                    preferred_element_type=jnp.float32) + b2[...]
        # channel-wise LayerNorm (LayerNorm2D_NCHW), stats in a single traversal.
        # Padded lanes are exactly zero, so sums over the padded width equal sums
        # over the true width; divide by the true channel count.
        inv_c = 1.0 / float(ln_divisors[i])
        s = jnp.sum(h, axis=-1, keepdims=True)
        ss = jnp.sum(h * h, axis=-1, keepdims=True)
        mu = s * inv_c
        var = ss * inv_c - mu * mu
        h = (h - mu) * jax.lax.rsqrt(var + EPS) * gamma[...] + beta[...]
        h = _leaky(h)

    d_pad = h.shape[-1]
    # additive mask (0 keep / -inf drop), mirroring `adjusted_x[x_mask == -inf] = -inf`;
    # broadcast of the (tb, tn, 1) mask over lanes is a cheap lane splat.
    addm = jnp.where(mask_ref[...] == -jnp.inf,
                     jnp.float32(-jnp.inf), jnp.float32(0.0))
    h3 = h.reshape(tb, tn, d_pad) + addm
    tile_max = jnp.max(h3, axis=1)                        # (tb, d_pad)

    # running max across sequence tiles
    @pl.when(n_idx == 0)
    def _():
        acc_ref[...] = jnp.full_like(acc_ref, -jnp.inf)

    acc_ref[...] = jnp.maximum(acc_ref[...], tile_max)

    @pl.when(n_idx == n_last)
    def _():
        pooled = acc_ref[...]
        # fused decoder MLP: Linear -> LeakyReLU -> Linear -> LeakyReLU (Dropout(0)=id)
        y = jnp.dot(pooled.astype(MATMUL_DTYPE), dw1[...],
                    preferred_element_type=jnp.float32) + db1[...]
        y = _leaky(y)
        y = jnp.dot(y.astype(MATMUL_DTYPE), dw2[...],
                    preferred_element_type=jnp.float32) + db2[...]
        out_ref[...] = _leaky(y)[:, None, :]              # (tb, 1, pad(4*Dout)) lane-dense


# ----------------------------------------------------------------------------
# Tiling
# ----------------------------------------------------------------------------
def _choose_tiles(batch, seq, p_act_max, target_rows=2048, act_budget_bytes=16 << 20):
    """Pick (tb, tn) with tb | batch and tn | seq (tn a multiple of 8 when tiling).
    Aims for ~target_rows rows per grid step (amortizes the ~0.35us/step overhead,
    HBM-roofline-sized DMAs) while bounding the f32 activation working set so the
    same tiles fit v7x's smaller VMEM; keeps >= 2 batch steps so v7x's two
    TensorCores both get work."""
    max_rows = int(max(64, min(target_rows, act_budget_bytes // (6 * 4 * p_act_max))))

    if seq <= max_rows:
        tn = seq
    else:
        tn = 0
        for cand in range(8, max_rows + 1, 8):
            if seq % cand == 0:
                tn = cand
        if tn == 0:
            # TODO(synk): N has no multiple-of-8 divisor within the budget; fall back to
            # one full-length sequence tile (correct, but unbounded working set).
            tn = seq

    max_tb = max(1, max_rows // tn)
    if batch >= 2:
        max_tb = min(max_tb, batch // 2)    # guarantee >= 2 "parallel" steps (v7x megacore)
    tb = 1
    for cand in range(1, max_tb + 1):
        if batch % cand == 0:
            tb = cand
    return tb, tn


# ----------------------------------------------------------------------------
# Parameter init (PyTorch-equivalent shapes, transposed to [in, out]) and one-time
# kernel-side preparation (zero-pad channel dims to 128 lanes, cast weights to bf16).
# ----------------------------------------------------------------------------
def init_params(key, hidden_dims):
    params = {"hidden_dims": tuple(hidden_dims), "conv_blocks": [], "decoder": {}}

    def dense(key, cin, cout):
        scale = 1.0 / jnp.sqrt(jnp.float32(cin))
        return jax.random.normal(key, (cin, cout), jnp.float32) * scale

    for i in range(len(hidden_dims) - 1):
        cin, cout = hidden_dims[i], hidden_dims[i + 1]
        k1, k2, k3, k4, key = jax.random.split(key, 5)
        params["conv_blocks"].append({
            "w1": dense(k1, cin, cout),                                  # Conv1d #1 (k=1)
            "b1": jax.random.normal(k2, (1, cout), jnp.float32) * 0.01,
            "w2": dense(k3, cout, cout),                                 # Conv1d #2 (k=1)
            "b2": jax.random.normal(k4, (1, cout), jnp.float32) * 0.01,
            "gamma": jnp.ones((1, cout), jnp.float32),                   # LayerNorm affine
            "beta": jnp.zeros((1, cout), jnp.float32),
        })

    d = hidden_dims[-1]
    k1, k2, k3, k4, key = jax.random.split(key, 5)
    params["decoder"] = {
        "w1": dense(k1, d, 2 * d),                                       # Linear(d, 2d)
        "b1": jax.random.normal(k2, (1, 2 * d), jnp.float32) * 0.01,
        "w2": dense(k3, 2 * d, 4 * d),                                   # Linear(2d, 4d)
        "b2": jax.random.normal(k4, (1, 4 * d), jnp.float32) * 0.01,
    }
    return params


def _pad2(a, rows, cols, dtype):
    out = jnp.zeros((rows, cols), dtype)
    return out.at[: a.shape[0], : a.shape[1]].set(a.astype(dtype))


def prepare_params(params):
    """One-time: pad channel dims to 128 lanes and cast weights to bf16."""
    hidden = list(params["hidden_dims"])
    nb = len(hidden) - 1
    d = hidden[-1]
    # x's own channel dim stays unpadded (avoids a wrapper-side HBM pad pass)
    pdims = [hidden[0]] + [_pad_to_lane(c) for c in hidden[1:]]

    flat, ln_divs = [], []
    for i, blk in enumerate(params["conv_blocks"]):
        cin_p, cout_p = pdims[i], pdims[i + 1]
        flat += [
            _pad2(blk["w1"], cin_p, cout_p, MATMUL_DTYPE),
            _pad2(blk["b1"], 1, cout_p, jnp.float32),
            _pad2(blk["w2"], cout_p, cout_p, MATMUL_DTYPE),
            _pad2(blk["b2"], 1, cout_p, jnp.float32),
            _pad2(blk["gamma"], 1, cout_p, jnp.float32),   # padded gamma/beta = 0
            _pad2(blk["beta"], 1, cout_p, jnp.float32),
        ]
        ln_divs.append(hidden[i + 1])                      # true-C LayerNorm divisor

    dec = params["decoder"]
    d_p, d2_p, d4_p = pdims[-1], _pad_to_lane(2 * d), _pad_to_lane(4 * d)
    flat += [
        _pad2(dec["w1"], d_p, d2_p, MATMUL_DTYPE),
        _pad2(dec["b1"], 1, d2_p, jnp.float32),
        _pad2(dec["w2"], d2_p, d4_p, MATMUL_DTYPE),
        _pad2(dec["b2"], 1, d4_p, jnp.float32),
    ]
    return {
        "num_blocks": nb,
        "ln_divisors": tuple(ln_divs),
        "flat": flat,
        "c_in": hidden[0],
        "d_out": d,
        "d_out_pad": d_p,
        "out4_pad": d4_p,
        "p_act_max": max(pdims[1:]),
    }


# ----------------------------------------------------------------------------
# Forward wrapper (single fused pallas_call)
# ----------------------------------------------------------------------------
def reduce_embedding_forward(prepared, x, x_mask, *, target_rows=2048):
    B, N, C = x.shape
    assert C == prepared["c_in"], (C, prepared["c_in"])
    d = prepared["d_out"]
    d_p = prepared["d_out_pad"]
    d4_p = prepared["out4_pad"]
    nb = prepared["num_blocks"]
    flat = prepared["flat"]

    tb, tn = _choose_tiles(B, N, prepared["p_act_max"], target_rows)
    grid = (B // tb, N // tn)

    mask3 = x_mask.reshape(B, N, 1)     # metadata-only; -inf test happens in-kernel

    rows = tb * tn
    param_bytes = sum(int(p.size) * p.dtype.itemsize for p in flat)
    est = (6 * rows * prepared["p_act_max"] * 4        # f32 activation intermediates
           + 2 * rows * C * x.dtype.itemsize           # double-buffered x blocks
           + 2 * rows * 4                              # mask blocks
           + 2 * tb * d4_p * 4 + tb * d_p * 4          # out blocks + running-max scratch
           + 2 * param_bytes)                          # parameter blocks
    vmem_limit = int(min(max(2 * est, 32 << 20), 48 << 20))   # cap safe on v7x (64 MiB phys)

    kernel = functools.partial(_fused_kernel, nb, prepared["ln_divisors"], tb, tn)

    in_specs = [
        pl.BlockSpec((tb, tn, 1), lambda b, n: (b, n, 0)),    # raw mask  [B, N, 1]
        pl.BlockSpec((tb, tn, C), lambda b, n: (b, n, 0)),    # x         [B, N, C]
    ]
    # parameters: constant block index across the whole grid -> stay VMEM-resident
    in_specs += [pl.BlockSpec(p.shape, lambda b, n: (0, 0)) for p in flat]

    out = pl.pallas_call(
        kernel,
        grid=grid,
        in_specs=in_specs,
        out_specs=pl.BlockSpec((tb, 1, d4_p), lambda b, n: (b, 0, 0)),
        out_shape=jax.ShapeDtypeStruct((B, 1, d4_p), jnp.float32),
        scratch_shapes=[pltpu.VMEM((tb, d_p), jnp.float32)],  # running max over seq tiles
        compiler_params=pltpu.CompilerParams(
            dimension_semantics=("parallel", "arbitrary"),
            vmem_limit_bytes=vmem_limit,
        ),
    )(mask3, x, *flat)

    y = out[:, 0, :]
    if d4_p != 4 * d:
        y = y[:, : 4 * d]
    return y.reshape(B, d, 2, 2)        # == decoder_input(pooled).view(-1, D, 2, 2)


# ----------------------------------------------------------------------------
# Pure-JAX reference (mirrors the PyTorch forward; same bf16-operand matmul policy)
# ----------------------------------------------------------------------------
def reference_forward(params, x, x_mask):
    def mm(a, w):
        return jnp.dot(a.astype(MATMUL_DTYPE), w.astype(MATMUL_DTYPE),
                       preferred_element_type=jnp.float32)

    h = x.astype(jnp.float32)
    for blk in params["conv_blocks"]:
        h = _leaky(mm(h, blk["w1"]) + blk["b1"])
        h = mm(h, blk["w2"]) + blk["b2"]
        mu = h.mean(-1, keepdims=True)
        var = ((h - mu) ** 2).mean(-1, keepdims=True)
        h = (h - mu) * jax.lax.rsqrt(var + EPS) * blk["gamma"] + blk["beta"]
        h = _leaky(h)
    m = x_mask[..., None].astype(jnp.float32)
    h = jnp.where(m == -jnp.inf, jnp.float32(-jnp.inf), h)
    pooled = h.max(axis=1)
    dec = params["decoder"]
    y = _leaky(mm(pooled, dec["w1"]) + dec["b1"])
    y = _leaky(mm(y, dec["w2"]) + dec["b2"])
    return y.reshape(x.shape[0], params["hidden_dims"][-1], 2, 2)


if __name__ == "__main__":
    B, N = 2, 8
    hidden_dims = [32, 64, 32]   # input dim D=32, output_dim=32 (4*Dout = 128 lanes)

    key = jax.random.PRNGKey(0)
    kp, kx = jax.random.split(key)
    params = init_params(kp, hidden_dims)
    prepared = prepare_params(params)    # pad/cast weights once, not per forward

    x = jax.random.normal(kx, (B, N, hidden_dims[0]), jnp.float32)
    # mask: 0.0 = keep, -inf = masked out (last two positions of batch 1 masked)
    x_mask = jnp.zeros((B, N), jnp.float32).at[1, -2:].set(-jnp.inf)

    out = reduce_embedding_forward(prepared, x, x_mask)
    out = jax.block_until_ready(out)

    ref = reference_forward(params, x, x_mask)
    assert out.shape == (B, hidden_dims[-1], 2, 2), out.shape
    assert bool(jnp.isfinite(out).all())
    assert jnp.allclose(out, ref, atol=2e-3, rtol=2e-3), float(jnp.max(jnp.abs(out - ref)))

    print("KERNEL_OK")
</pallas_src>

<mosaic_0001>
module attributes {stable_mosaic.version = 11 : i64} {
  func.func @_fused_kernel(%arg0: i32, %arg1: i32, %arg2: memref<1x8x1xf32, #tpu.memory_space<vmem>>, %arg3: memref<1x8x32xf32, #tpu.memory_space<vmem>>, %arg4: memref<32x128xbf16, #tpu.memory_space<vmem>>, %arg5: memref<1x128xf32, #tpu.memory_space<vmem>>, %arg6: memref<128x128xbf16, #tpu.memory_space<vmem>>, %arg7: memref<1x128xf32, #tpu.memory_space<vmem>>, %arg8: memref<1x128xf32, #tpu.memory_space<vmem>>, %arg9: memref<1x128xf32, #tpu.memory_space<vmem>>, %arg10: memref<128x128xbf16, #tpu.memory_space<vmem>>, %arg11: memref<1x128xf32, #tpu.memory_space<vmem>>, %arg12: memref<128x128xbf16, #tpu.memory_space<vmem>>, %arg13: memref<1x128xf32, #tpu.memory_space<vmem>>, %arg14: memref<1x128xf32, #tpu.memory_space<vmem>>, %arg15: memref<1x128xf32, #tpu.memory_space<vmem>>, %arg16: memref<128x128xbf16, #tpu.memory_space<vmem>>, %arg17: memref<1x128xf32, #tpu.memory_space<vmem>>, %arg18: memref<128x128xbf16, #tpu.memory_space<vmem>>, %arg19: memref<1x128xf32, #tpu.memory_space<vmem>>, %arg20: memref<1x1x128xf32, #tpu.memory_space<vmem>>, %arg21: memref<1x128xf32, #tpu.memory_space<vmem>>) attributes {dimension_semantics = [#tpu.dimension_semantics<parallel>, #tpu.dimension_semantics<arbitrary>], iteration_bounds = array<i64: 2, 1>, scalar_prefetch = 0 : i64, scratch_operands = 1 : i64, tpu.core_type = #tpu.core_type<tc>, window_params = [{transform_indices = @transform_0, window_bounds = array<i64: 1, 8, 1>}, {transform_indices = @transform_1, window_bounds = array<i64: 1, 8, 32>}, {pipeline_mode = #tpu.pipeline_mode<synchronous>, transform_indices = @transform_2, window_bounds = array<i64: 32, 128>}, {pipeline_mode = #tpu.pipeline_mode<synchronous>, transform_indices = @transform_3, window_bounds = array<i64: 1, 128>}, {pipeline_mode = #tpu.pipeline_mode<synchronous>, transform_indices = @transform_4, window_bounds = array<i64: 128, 128>}, {pipeline_mode = #tpu.pipeline_mode<synchronous>, transform_indices = @transform_5, window_bounds = array<i64: 1, 128>}, {pipeline_mode = #tpu.pipeline_mode<synchronous>, transform_indices = @transform_6, window_bounds = array<i64: 1, 128>}, {pipeline_mode = #tpu.pipeline_mode<synchronous>, transform_indices = @transform_7, window_bounds = array<i64: 1, 128>}, {pipeline_mode = #tpu.pipeline_mode<synchronous>, transform_indices = @transform_8, window_bounds = array<i64: 128, 128>}, {pipeline_mode = #tpu.pipeline_mode<synchronous>, transform_indices = @transform_9, window_bounds = array<i64: 1, 128>}, {pipeline_mode = #tpu.pipeline_mode<synchronous>, transform_indices = @transform_10, window_bounds = array<i64: 128, 128>}, {pipeline_mode = #tpu.pipeline_mode<synchronous>, transform_indices = @transform_11, window_bounds = array<i64: 1, 128>}, {pipeline_mode = #tpu.pipeline_mode<synchronous>, transform_indices = @transform_12, window_bounds = array<i64: 1, 128>}, {pipeline_mode = #tpu.pipeline_mode<synchronous>, transform_indices = @transform_13, window_bounds = array<i64: 1, 128>}, {pipeline_mode = #tpu.pipeline_mode<synchronous>, transform_indices = @transform_14, window_bounds = array<i64: 128, 128>}, {pipeline_mode = #tpu.pipeline_mode<synchronous>, transform_indices = @transform_15, window_bounds = array<i64: 1, 128>}, {pipeline_mode = #tpu.pipeline_mode<synchronous>, transform_indices = @transform_16, window_bounds = array<i64: 128, 128>}, {pipeline_mode = #tpu.pipeline_mode<synchronous>, transform_indices = @transform_17, window_bounds = array<i64: 1, 128>}, {transform_indices = @transform_18, window_bounds = array<i64: 1, 1, 128>}]} {
    %c0 = arith.constant 0 : index
    %c0_0 = arith.constant 0 : index
    %c0_1 = arith.constant 0 : index
    %0 = vector.load %arg3[%c0, %c0_0, %c0_1] : memref<1x8x32xf32, #tpu.memory_space<vmem>>, vector<1x8x32xf32>
    %1 = vector.shape_cast %0 : vector<1x8x32xf32> to vector<8x32xf32>
    %2 = arith.truncf %1 : vector<8x32xf32> to vector<8x32xbf16>
    %c0_2 = arith.constant 0 : index
    %c0_3 = arith.constant 0 : index
    %3 = vector.load %arg4[%c0_2, %c0_3] : memref<32x128xbf16, #tpu.memory_space<vmem>>, vector<32x128xbf16>
    %cst = arith.constant dense<0.000000e+00> : vector<8x128xf32>
    %4 = tpu.matmul %2, %3, %cst {dimension_numbers = #tpu.dot_dimension_numbers<[1], [0], [0], [1], [0, 0, 1, 1], [], []>} : vector<8x32xbf16>, vector<32x128xbf16>, vector<8x128xf32> -> vector<8x128xf32>
    %c0_4 = arith.constant 0 : index
    %c0_5 = arith.constant 0 : index
    %5 = vector.load %arg5[%c0_4, %c0_5] : memref<1x128xf32, #tpu.memory_space<vmem>>, vector<1x128xf32>
    %6 = vector.broadcast %5 : vector<1x128xf32> to vector<8x128xf32>
    %7 = arith.addf %4, %6 : vector<8x128xf32>
    %cst_6 = arith.constant 0.000000e+00 : f32
    %8 = vector.broadcast %cst_6 : f32 to vector<8x128xf32>
    %9 = arith.cmpf ogt, %7, %8 : vector<8x128xf32>
    %cst_7 = arith.constant 0.00999999977 : f32
    %10 = vector.broadcast %cst_7 : f32 to vector<8x128xf32>
    %11 = arith.mulf %10, %7 : vector<8x128xf32>
    %12 = arith.select %9, %7, %11 : vector<8x128xi1>, vector<8x128xf32>
    %13 = arith.truncf %12 : vector<8x128xf32> to vector<8x128xbf16>
    %c0_8 = arith.constant 0 : index
    %c0_9 = arith.constant 0 : index
    %14 = vector.load %arg6[%c0_8, %c0_9] : memref<128x128xbf16, #tpu.memory_space<vmem>>, vector<128x128xbf16>
    %cst_10 = arith.constant dense<0.000000e+00> : vector<8x128xf32>
    %15 = tpu.matmul %13, %14, %cst_10 {dimension_numbers = #tpu.dot_dimension_numbers<[1], [0], [0], [1], [0, 0, 1, 1], [], []>} : vector<8x128xbf16>, vector<128x128xbf16>, vector<8x128xf32> -> vector<8x128xf32>
    %c0_11 = arith.constant 0 : index
    %c0_12 = arith.constant 0 : index
    %16 = vector.load %arg7[%c0_11, %c0_12] : memref<1x128xf32, #tpu.memory_space<vmem>>, vector<1x128xf32>
    %17 = vector.broadcast %16 : vector<1x128xf32> to vector<8x128xf32>
    %18 = arith.addf %15, %17 : vector<8x128xf32>
    %cst_13 = arith.constant dense<0.000000e+00> : vector<8xf32>
    %19 = vector.multi_reduction <add>, %18, %cst_13 [1] : vector<8x128xf32> to vector<8xf32>
    %20 = vector.shape_cast %19 : vector<8xf32> to vector<8x1xf32>
    %21 = arith.mulf %18, %18 : vector<8x128xf32>
    %cst_14 = arith.constant dense<0.000000e+00> : vector<8xf32>
    %22 = vector.multi_reduction <add>, %21, %cst_14 [1] : vector<8x128xf32> to vector<8xf32>
    %23 = vector.shape_cast %22 : vector<8xf32> to vector<8x1xf32>
    %cst_15 = arith.constant 1.562500e-02 : f32
    %24 = vector.broadcast %cst_15 : f32 to vector<8x1xf32>
    %25 = arith.mulf %20, %24 : vector<8x1xf32>
    %cst_16 = arith.constant 1.562500e-02 : f32
    %26 = vector.broadcast %cst_16 : f32 to vector<8x1xf32>
    %27 = arith.mulf %23, %26 : vector<8x1xf32>
    %28 = arith.mulf %25, %25 : vector<8x1xf32>
    %29 = arith.subf %27, %28 : vector<8x1xf32>
    %30 = vector.broadcast %25 : vector<8x1xf32> to vector<8x128xf32>
    %31 = arith.subf %18, %30 : vector<8x128xf32>
    %cst_17 = arith.constant 9.99999974E-6 : f32
    %32 = vector.broadcast %cst_17 : f32 to vector<8x1xf32>
    %33 = arith.addf %29, %32 : vector<8x1xf32>
    %34 = math.rsqrt %33 : vector<8x1xf32>
    %35 = vector.broadcast %34 : vector<8x1xf32> to vector<8x128xf32>
    %36 = arith.mulf %31, %35 : vector<8x128xf32>
    %c0_18 = arith.constant 0 : index
    %c0_19 = arith.constant 0 : index
    %37 = vector.load %arg8[%c0_18, %c0_19] : memref<1x128xf32, #tpu.memory_space<vmem>>, vector<1x128xf32>
    %38 = vector.broadcast %37 : vector<1x128xf32> to vector<8x128xf32>
    %39 = arith.mulf %36, %38 : vector<8x128xf32>
    %c0_20 = arith.constant 0 : index
    %c0_21 = arith.constant 0 : index
    %40 = vector.load %arg9[%c0_20, %c0_21] : memref<1x128xf32, #tpu.memory_space<vmem>>, vector<1x128xf32>
    %41 = vector.broadcast %40 : vector<1x128xf32> to vector<8x128xf32>
    %42 = arith.addf %39, %41 : vector<8x128xf32>
    %cst_22 = arith.constant 0.000000e+00 : f32
    %43 = vector.broadcast %cst_22 : f32 to vector<8x128xf32>
    %44 = arith.cmpf ogt, %42, %43 : vector<8x128xf32>
    %cst_23 = arith.constant 0.00999999977 : f32
    %45 = vector.broadcast %cst_23 : f32 to vector<8x128xf32>
    %46 = arith.mulf %45, %42 : vector<8x128xf32>
    %47 = arith.select %44, %42, %46 : vector<8x128xi1>, vector<8x128xf32>
    %48 = arith.truncf %47 : vector<8x128xf32> to vector<8x128xbf16>
    %c0_24 = arith.constant 0 : index
    %c0_25 = arith.constant 0 : index
    %49 = vector.load %arg10[%c0_24, %c0_25] : memref<128x128xbf16, #tpu.memory_space<vmem>>, vector<128x128xbf16>
    %cst_26 = arith.constant dense<0.000000e+00> : vector<8x128xf32>
    %50 = tpu.matmul %48, %49, %cst_26 {dimension_numbers = #tpu.dot_dimension_numbers<[1], [0], [0], [1], [0, 0, 1, 1], [], []>} : vector<8x128xbf16>, vector<128x128xbf16>, vector<8x128xf32> -> vector<8x128xf32>
    %c0_27 = arith.constant 0 : index
    %c0_28 = arith.constant 0 : index
    %51 = vector.load %arg11[%c0_27, %c0_28] : memref<1x128xf32, #tpu.memory_space<vmem>>, vector<1x128xf32>
    %52 = vector.broadcast %51 : vector<1x128xf32> to vector<8x128xf32>
    %53 = arith.addf %50, %52 : vector<8x128xf32>
    %cst_29 = arith.constant 0.000000e+00 : f32
    %54 = vector.broadcast %cst_29 : f32 to vector<8x128xf32>
    %55 = arith.cmpf ogt, %53, %54 : vector<8x128xf32>
    %cst_30 = arith.constant 0.00999999977 : f32
    %56 = vector.broadcast %cst_30 : f32 to vector<8x128xf32>
    %57 = arith.mulf %56, %53 : vector<8x128xf32>
    %58 = arith.select %55, %53, %57 : vector<8x128xi1>, vector<8x128xf32>
    %59 = arith.truncf %58 : vector<8x128xf32> to vector<8x128xbf16>
    %c0_31 = arith.constant 0 : index
    %c0_32 = arith.constant 0 : index
    %60 = vector.load %arg12[%c0_31, %c0_32] : memref<128x128xbf16, #tpu.memory_space<vmem>>, vector<128x128xbf16>
    %cst_33 = arith.constant dense<0.000000e+00> : vector<8x128xf32>
    %61 = tpu.matmul %59, %60, %cst_33 {dimension_numbers = #tpu.dot_dimension_numbers<[1], [0], [0], [1], [0, 0, 1, 1], [], []>} : vector<8x128xbf16>, vector<128x128xbf16>, vector<8x128xf32> -> vector<8x128xf32>
    %c0_34 = arith.constant 0 : index
    %c0_35 = arith.constant 0 : index
    %62 = vector.load %arg13[%c0_34, %c0_35] : memref<1x128xf32, #tpu.memory_space<vmem>>, vector<1x128xf32>
    %63 = vector.broadcast %62 : vector<1x128xf32> to vector<8x128xf32>
    %64 = arith.addf %61, %63 : vector<8x128xf32>
    %cst_36 = arith.constant dense<0.000000e+00> : vector<8xf32>
    %65 = vector.multi_reduction <add>, %64, %cst_36 [1] : vector<8x128xf32> to vector<8xf32>
    %66 = vector.shape_cast %65 : vector<8xf32> to vector<8x1xf32>
    %67 = arith.mulf %64, %64 : vector<8x128xf32>
    %cst_37 = arith.constant dense<0.000000e+00> : vector<8xf32>
    %68 = vector.multi_reduction <add>, %67, %cst_37 [1] : vector<8x128xf32> to vector<8xf32>
    %69 = vector.shape_cast %68 : vector<8xf32> to vector<8x1xf32>
    %cst_38 = arith.constant 3.125000e-02 : f32
    %70 = vector.broadcast %cst_38 : f32 to vector<8x1xf32>
    %71 = arith.mulf %66, %70 : vector<8x1xf32>
    %cst_39 = arith.constant 3.125000e-02 : f32
    %72 = vector.broadcast %cst_39 : f32 to vector<8x1xf32>
    %73 = arith.mulf %69, %72 : vector<8x1xf32>
    %74 = arith.mulf %71, %71 : vector<8x1xf32>
    %75 = arith.subf %73, %74 : vector<8x1xf32>
    %76 = vector.broadcast %71 : vector<8x1xf32> to vector<8x128xf32>
    %77 = arith.subf %64, %76 : vector<8x128xf32>
    %cst_40 = arith.constant 9.99999974E-6 : f32
    %78 = vector.broadcast %cst_40 : f32 to vector<8x1xf32>
    %79 = arith.addf %75, %78 : vector<8x1xf32>
    %80 = math.rsqrt %79 : vector<8x1xf32>
    %81 = vector.broadcast %80 : vector<8x1xf32> to vector<8x128xf32>
    %82 = arith.mulf %77, %81 : vector<8x128xf32>
    %c0_41 = arith.constant 0 : index
    %c0_42 = arith.constant 0 : index
    %83 = vector.load %arg14[%c0_41, %c0_42] : memref<1x128xf32, #tpu.memory_space<vmem>>, vector<1x128xf32>
    %84 = vector.broadcast %83 : vector<1x128xf32> to vector<8x128xf32>
    %85 = arith.mulf %82, %84 : vector<8x128xf32>
    %c0_43 = arith.constant 0 : index
    %c0_44 = arith.constant 0 : index
    %86 = vector.load %arg15[%c0_43, %c0_44] : memref<1x128xf32, #tpu.memory_space<vmem>>, vector<1x128xf32>
    %87 = vector.broadcast %86 : vector<1x128xf32> to vector<8x128xf32>
    %88 = arith.addf %85, %87 : vector<8x128xf32>
    %cst_45 = arith.constant 0.000000e+00 : f32
    %89 = vector.broadcast %cst_45 : f32 to vector<8x128xf32>
    %90 = arith.cmpf ogt, %88, %89 : vector<8x128xf32>
    %cst_46 = arith.constant 0.00999999977 : f32
    %91 = vector.broadcast %cst_46 : f32 to vector<8x128xf32>
    %92 = arith.mulf %91, %88 : vector<8x128xf32>
    %93 = arith.select %90, %88, %92 : vector<8x128xi1>, vector<8x128xf32>
    %c0_47 = arith.constant 0 : index
    %c0_48 = arith.constant 0 : index
    %c0_49 = arith.constant 0 : index
    %94 = vector.load %arg2[%c0_47, %c0_48, %c0_49] : memref<1x8x1xf32, #tpu.memory_space<vmem>>, vector<1x8x1xf32>
    %cst_50 = arith.constant 0xFF800000 : f32
    %95 = vector.broadcast %cst_50 : f32 to vector<1x8x1xf32>
    %96 = arith.cmpf oeq, %94, %95 : vector<1x8x1xf32>
    %cst_51 = arith.constant 0xFF800000 : f32
    %cst_52 = arith.constant 0.000000e+00 : f32
    %97 = vector.broadcast %cst_51 : f32 to vector<1x8x1xf32>
    %98 = vector.broadcast %cst_52 : f32 to vector<1x8x1xf32>
    %99 = arith.select %96, %97, %98 : vector<1x8x1xi1>, vector<1x8x1xf32>
    %100 = vector.shape_cast %93 : vector<8x128xf32> to vector<1x8x128xf32>
    %101 = vector.broadcast %99 : vector<1x8x1xf32> to vector<1x8x128xf32>
    %102 = arith.addf %100, %101 : vector<1x8x128xf32>
    %cst_53 = arith.constant dense<0xFF800000> : vector<1x128xf32>
    %103 = vector.multi_reduction <maximumf>, %102, %cst_53 [1] : vector<1x8x128xf32> to vector<1x128xf32>
    %c0_i32 = arith.constant 0 : i32
    %104 = arith.cmpi eq, %arg1, %c0_i32 : i32
    %105 = arith.extui %104 : i1 to i32
    %c0_i32_54 = arith.constant 0 : i32
    %106 = arith.cmpi ne, %105, %c0_i32_54 : i32
    scf.if %106 {
      %cst_61 = arith.constant 0xFF800000 : f32
      %113 = vector.broadcast %cst_61 : f32 to vector<1x128xf32>
      %c0_62 = arith.constant 0 : index
      %c0_63 = arith.constant 0 : index
      %114 = vector.load %arg21[%c0_62, %c0_63] : memref<1x128xf32, #tpu.memory_space<vmem>>, vector<1x128xf32>
      tpu.vector_store %arg21[%c0_62, %c0_63], %113 {strides = array<i32>} : memref<1x128xf32, #tpu.memory_space<vmem>>, vector<1x128xf32>,
    } else {
    }
    %c0_55 = arith.constant 0 : index
    %c0_56 = arith.constant 0 : index
    %107 = vector.load %arg21[%c0_55, %c0_56] : memref<1x128xf32, #tpu.memory_space<vmem>>, vector<1x128xf32>
    %108 = arith.maximumf %107, %103 : vector<1x128xf32>
    %c0_57 = arith.constant 0 : index
    %c0_58 = arith.constant 0 : index
    %109 = vector.load %arg21[%c0_57, %c0_58] : memref<1x128xf32, #tpu.memory_space<vmem>>, vector<1x128xf32>
    tpu.vector_store %arg21[%c0_57, %c0_58], %108 {strides = array<i32>} : memref<1x128xf32, #tpu.memory_space<vmem>>, vector<1x128xf32>,
    %c0_i32_59 = arith.constant 0 : i32
    %110 = arith.cmpi eq, %arg1, %c0_i32_59 : i32
    %111 = arith.extui %110 : i1 to i32
    %c0_i32_60 = arith.constant 0 : i32
    %112 = arith.cmpi ne, %111, %c0_i32_60 : i32
    scf.if %112 {
      %c0_61 = arith.constant 0 : index
      %c0_62 = arith.constant 0 : index
      %113 = vector.load %arg21[%c0_61, %c0_62] : memref<1x128xf32, #tpu.memory_space<vmem>>, vector<1x128xf32>
      %114 = arith.truncf %113 : vector<1x128xf32> to vector<1x128xbf16>
      %c0_63 = arith.constant 0 : index
      %c0_64 = arith.constant 0 : index
      %115 = vector.load %arg16[%c0_63, %c0_64] : memref<128x128xbf16, #tpu.memory_space<vmem>>, vector<128x128xbf16>
      %cst_65 = arith.constant dense<0.000000e+00> : vector<1x128xf32>
      %116 = tpu.matmul %114, %115, %cst_65 {dimension_numbers = #tpu.dot_dimension_numbers<[1], [0], [0], [1], [0, 0, 1, 1], [], []>} : vector<1x128xbf16>, vector<128x128xbf16>, vector<1x128xf32> -> vector<1x128xf32>
      %c0_66 = arith.constant 0 : index
      %c0_67 = arith.constant 0 : index
      %117 = vector.load %arg17[%c0_66, %c0_67] : memref<1x128xf32, #tpu.memory_space<vmem>>, vector<1x128xf32>
      %118 = arith.addf %116, %117 : vector<1x128xf32>
      %cst_68 = arith.constant 0.000000e+00 : f32
      %119 = vector.broadcast %cst_68 : f32 to vector<1x128xf32>
      %120 = arith.cmpf ogt, %118, %119 : vector<1x128xf32>
      %cst_69 = arith.constant 0.00999999977 : f32
      %121 = vector.broadcast %cst_69 : f32 to vector<1x128xf32>
      %122 = arith.mulf %121, %118 : vector<1x128xf32>
      %123 = arith.select %120, %118, %122 : vector<1x128xi1>, vector<1x128xf32>
      %124 = arith.truncf %123 : vector<1x128xf32> to vector<1x128xbf16>
      %c0_70 = arith.constant 0 : index
      %c0_71 = arith.constant 0 : index
      %125 = vector.load %arg18[%c0_70, %c0_71] : memref<128x128xbf16, #tpu.memory_space<vmem>>, vector<128x128xbf16>
      %cst_72 = arith.constant dense<0.000000e+00> : vector<1x128xf32>
      %126 = tpu.matmul %124, %125, %cst_72 {dimension_numbers = #tpu.dot_dimension_numbers<[1], [0], [0], [1], [0, 0, 1, 1], [], []>} : vector<1x128xbf16>, vector<128x128xbf16>, vector<1x128xf32> -> vector<1x128xf32>
      %c0_73 = arith.constant 0 : index
      %c0_74 = arith.constant 0 : index
      %127 = vector.load %arg19[%c0_73, %c0_74] : memref<1x128xf32, #tpu.memory_space<vmem>>, vector<1x128xf32>
      %128 = arith.addf %126, %127 : vector<1x128xf32>
      %cst_75 = arith.constant 0.000000e+00 : f32
      %129 = vector.broadcast %cst_75 : f32 to vector<1x128xf32>
      %130 = arith.cmpf ogt, %128, %129 : vector<1x128xf32>
      %cst_76 = arith.constant 0.00999999977 : f32
      %131 = vector.broadcast %cst_76 : f32 to vector<1x128xf32>
      %132 = arith.mulf %131, %128 : vector<1x128xf32>
      %133 = arith.select %130, %128, %132 : vector<1x128xi1>, vector<1x128xf32>
      %134 = vector.shape_cast %133 : vector<1x128xf32> to vector<1x1x128xf32>
      %c0_77 = arith.constant 0 : index
      %c0_78 = arith.constant 0 : index
      %c0_79 = arith.constant 0 : index
      %135 = vector.load %arg20[%c0_77, %c0_78, %c0_79] : memref<1x1x128xf32, #tpu.memory_space<vmem>>, vector<1x1x128xf32>
      tpu.vector_store %arg20[%c0_77, %c0_78, %c0_79], %134 {strides = array<i32>} : memref<1x1x128xf32, #tpu.memory_space<vmem>>, vector<1x1x128xf32>,
    } else {
    }
    return
  }
  func.func @transform_0(%arg0: i32, %arg1: i32) -> (i32, i32, i32) {
    %c0_i32 = arith.constant 0 : i32
    %c0_i32_0 = arith.constant 0 : i32
    return %arg0, %arg1, %c0_i32 : i32, i32, i32
  }
  func.func @transform_1(%arg0: i32, %arg1: i32) -> (i32, i32, i32) {
    %c0_i32 = arith.constant 0 : i32
    %c0_i32_0 = arith.constant 0 : i32
    return %arg0, %arg1, %c0_i32 : i32, i32, i32
  }
  func.func @transform_2(%arg0: i32, %arg1: i32) -> (i32, i32) {
    %c0_i32 = arith.constant 0 : i32
    %c0_i32_0 = arith.constant 0 : i32
    %c0_i32_1 = arith.constant 0 : i32
    return %c0_i32, %c0_i32_0 : i32, i32
  }
  func.func @transform_3(%arg0: i32, %arg1: i32) -> (i32, i32) {
    %c0_i32 = arith.constant 0 : i32
    %c0_i32_0 = arith.constant 0 : i32
    %c0_i32_1 = arith.constant 0 : i32
    return %c0_i32, %c0_i32_0 : i32, i32
  }
  func.func @transform_4(%arg0: i32, %arg1: i32) -> (i32, i32) {
    %c0_i32 = arith.constant 0 : i32
    %c0_i32_0 = arith.constant 0 : i32
    %c0_i32_1 = arith.constant 0 : i32
    return %c0_i32, %c0_i32_0 : i32, i32
  }
  func.func @transform_5(%arg0: i32, %arg1: i32) -> (i32, i32) {
    %c0_i32 = arith.constant 0 : i32
    %c0_i32_0 = arith.constant 0 : i32
    %c0_i32_1 = arith.constant 0 : i32
    return %c0_i32, %c0_i32_0 : i32, i32
  }
  func.func @transform_6(%arg0: i32, %arg1: i32) -> (i32, i32) {
    %c0_i32 = arith.constant 0 : i32
    %c0_i32_0 = arith.constant 0 : i32
    %c0_i32_1 = arith.constant 0 : i32
    return %c0_i32, %c0_i32_0 : i32, i32
  }
  func.func @transform_7(%arg0: i32, %arg1: i32) -> (i32, i32) {
    %c0_i32 = arith.constant 0 : i32
    %c0_i32_0 = arith.constant 0 : i32
    %c0_i32_1 = arith.constant 0 : i32
    return %c0_i32, %c0_i32_0 : i32, i32
  }
  func.func @transform_8(%arg0: i32, %arg1: i32) -> (i32, i32) {
    %c0_i32 = arith.constant 0 : i32
    %c0_i32_0 = arith.constant 0 : i32
    %c0_i32_1 = arith.constant 0 : i32
    return %c0_i32, %c0_i32_0 : i32, i32
  }
  func.func @transform_9(%arg0: i32, %arg1: i32) -> (i32, i32) {
    %c0_i32 = arith.constant 0 : i32
    %c0_i32_0 = arith.constant 0 : i32
    %c0_i32_1 = arith.constant 0 : i32
    return %c0_i32, %c0_i32_0 : i32, i32
  }
  func.func @transform_10(%arg0: i32, %arg1: i32) -> (i32, i32) {
    %c0_i32 = arith.constant 0 : i32
    %c0_i32_0 = arith.constant 0 : i32
    %c0_i32_1 = arith.constant 0 : i32
    return %c0_i32, %c0_i32_0 : i32, i32
  }
  func.func @transform_11(%arg0: i32, %arg1: i32) -> (i32, i32) {
    %c0_i32 = arith.constant 0 : i32
    %c0_i32_0 = arith.constant 0 : i32
    %c0_i32_1 = arith.constant 0 : i32
    return %c0_i32, %c0_i32_0 : i32, i32
  }
  func.func @transform_12(%arg0: i32, %arg1: i32) -> (i32, i32) {
    %c0_i32 = arith.constant 0 : i32
    %c0_i32_0 = arith.constant 0 : i32
    %c0_i32_1 = arith.constant 0 : i32
    return %c0_i32, %c0_i32_0 : i32, i32
  }
  func.func @transform_13(%arg0: i32, %arg1: i32) -> (i32, i32) {
    %c0_i32 = arith.constant 0 : i32
    %c0_i32_0 = arith.constant 0 : i32
    %c0_i32_1 = arith.constant 0 : i32
    return %c0_i32, %c0_i32_0 : i32, i32
  }
  func.func @transform_14(%arg0: i32, %arg1: i32) -> (i32, i32) {
    %c0_i32 = arith.constant 0 : i32
    %c0_i32_0 = arith.constant 0 : i32
    %c0_i32_1 = arith.constant 0 : i32
    return %c0_i32, %c0_i32_0 : i32, i32
  }
  func.func @transform_15(%arg0: i32, %arg1: i32) -> (i32, i32) {
    %c0_i32 = arith.constant 0 : i32
    %c0_i32_0 = arith.constant 0 : i32
    %c0_i32_1 = arith.constant 0 : i32
    return %c0_i32, %c0_i32_0 : i32, i32
  }
  func.func @transform_16(%arg0: i32, %arg1: i32) -> (i32, i32) {
    %c0_i32 = arith.constant 0 : i32
    %c0_i32_0 = arith.constant 0 : i32
    %c0_i32_1 = arith.constant 0 : i32
    return %c0_i32, %c0_i32_0 : i32, i32
  }
  func.func @transform_17(%arg0: i32, %arg1: i32) -> (i32, i32) {
    %c0_i32 = arith.constant 0 : i32
    %c0_i32_0 = arith.constant 0 : i32
    %c0_i32_1 = arith.constant 0 : i32
    return %c0_i32, %c0_i32_0 : i32, i32
  }
  func.func @transform_18(%arg0: i32, %arg1: i32) -> (i32, i32, i32) {
    %c0_i32 = arith.constant 0 : i32
    %c0_i32_0 = arith.constant 0 : i32
    %c0_i32_1 = arith.constant 0 : i32
    return %arg0, %c0_i32, %c0_i32_0 : i32, i32, i32
  }
}

</mosaic_0001>

<llo_original>
// kernel: tpu_custom_call.1
$region0: #{tpu_custom_call.1}
  #allocation0 [shape = 'u32[]', space=smem, size = 0x4, offset = 0x4, fixed_abs, tag = 'smem constant byte address 0x4 - core index']
  #allocation1 [shape = 'u32[144,128]{1,0:T(1,128)}', space=vmem, size = 0x12000, scoped, tag = 'internal scratch']
  #allocation2 [shape = 'f32[1,128]{1,0:T(1,128)}', space=vmem, size = 0x200, scoped, tag = 'scratch operand']
  %s0 = inlined_call_operand.vmem [shape: f32[2,8,1], index: 0, kind: input, shape index: {}]
  %s1 = inlined_call_operand.hbm [shape: f32[2,8,32], index: 1, kind: input, shape index: {}]
  %s2 = inlined_call_operand.hbm [shape: bf16[32,128], index: 2, kind: input, shape index: {}]
  %s3 = inlined_call_operand.vmem [shape: f32[1,128], index: 3, kind: input, shape index: {}]
  %s4 = inlined_call_operand.hbm [shape: bf16[128,128], index: 4, kind: input, shape index: {}]
  %s5 = inlined_call_operand.vmem [shape: f32[1,128], index: 5, kind: input, shape index: {}]
  %s6 = inlined_call_operand.vmem [shape: f32[1,128], index: 6, kind: input, shape index: {}]
  %s7 = inlined_call_operand.vmem [shape: f32[1,128], index: 7, kind: input, shape index: {}]
  %s8 = inlined_call_operand.hbm [shape: bf16[128,128], index: 8, kind: input, shape index: {}]
  %s9 = inlined_call_operand.vmem [shape: f32[1,128], index: 9, kind: input, shape index: {}]
  %s10 = inlined_call_operand.hbm [shape: bf16[128,128], index: 10, kind: input, shape index: {}]
  %s11 = inlined_call_operand.vmem [shape: f32[1,128], index: 11, kind: input, shape index: {}]
  %s12 = inlined_call_operand.vmem [shape: f32[1,128], index: 12, kind: input, shape index: {}]
  %s13 = inlined_call_operand.hbm [shape: f32[1,128], index: 13, kind: input, shape index: {}]
  %s14 = inlined_call_operand.vmem [shape: bf16[128,128], index: 14, kind: input, shape index: {}]
  %s15 = inlined_call_operand.vmem [shape: f32[1,128], index: 15, kind: input, shape index: {}]
  %s16 = inlined_call_operand.hbm [shape: bf16[128,128], index: 16, kind: input, shape index: {}]
  %s17 = inlined_call_operand.vmem [shape: f32[1,128], index: 17, kind: input, shape index: {}]
  %s18 = inlined_call_operand.hbm [shape: f32[2,1,128], index: 18, kind: output, shape index: {}]
  %s19 = sld [smem:[#allocation0]]
  $region141: #{tpu_custom_call.1} parent=0
    _
  %s21 = ssub.s32 1, %s19
  %s22 = scalar_select 0, %s21, %s19
  $region1: #{tpu_custom_call.1} parent=0
    #allocation3 [shape = 'u8[8192]{0}', space=vmem, size = 0x2000, scoped, tag = 'input window, operand 1']
    #allocation4 [shape = 's32[2]{0}', space=sflag, size = 0x8, scoped, tag = 'scoped memory for tpu_custom_call.1']
    #allocation5 [shape = 's32[2]{0}', space=sflag, size = 0x8, scoped, tag = 'scoped memory for tpu_custom_call.1']
    #allocation6 [shape = 'u8[8192]{0}', space=vmem, size = 0x2000, scoped, tag = 'input window, operand 2, single buffered']
    #allocation7 [shape = 's32[1]{0}', space=sflag, size = 0x4, scoped, tag = 'scoped memory for tpu_custom_call.1']
    #allocation8 [shape = 'u8[32768]{0}', space=vmem, size = 0x8000, scoped, tag = 'input window, operand 4, single buffered']
    #allocation9 [shape = 'u8[32768]{0}', space=vmem, size = 0x8000, scoped, tag = 'input window, operand 8, single buffered']
    #allocation10 [shape = 's32[1]{0}', space=sflag, size = 0x4, scoped, tag = 'scoped memory for tpu_custom_call.1']
    #allocation11 [shape = 'u8[32768]{0}', space=vmem, size = 0x8000, scoped, tag = 'input window, operand 10, single buffered']
    #allocation12 [shape = 'u8[512]{0}', space=vmem, size = 0x400, scoped, tag = 'input window, operand 13, single buffered']
    #allocation13 [shape = 's32[1]{0}', space=sflag, size = 0x4, scoped, tag = 'scoped memory for tpu_custom_call.1']
    #allocation14 [shape = 'u8[32768]{0}', space=vmem, size = 0x8000, scoped, tag = 'input window, operand 16, single buffered']
    #allocation15 [shape = 'u8[1024]{0}', space=vmem, size = 0x400, scoped, tag = 'output window, operand 0']
    %23 = vsyncpa [#allocation4], 0
    %s24 = scalar_lea.sflag [#allocation4], 1
    %25 = vsyncpa %s24, 0
    %26 = vsyncpa [#allocation7], 0
    %27 = vsyncpa [#allocation10], 0
    %28 = vsyncpa [#allocation13], 0
    %29 = vsyncpa [#allocation5], 0
    %s30 = scalar_lea.sflag [#allocation5], 1
    %31 = vsyncpa %s30, 0
    loop: start=0, step=1, limit=4
    $region2: #{tpu_custom_call.1} parent=1 // loop_pre_header
      _
    $region3: #{tpu_custom_call.1} parent=1 // loop_header
      %s33 = sphi 0, %s37
      %p34 = scmp.ge.s32.totalorder %s33, 4
      %s40 = sphi 0, %s52
      %s41 = sphi 0, %s48
      %s42 = sphi 0, %s40
      %s43 = sphi 0, %s41
      %s44 = sphi 0, %s42
      %s45 = sphi 0, %s43
      %s57 = sphi 0, %s59
      %s60 = sphi 0, %s57
      %s61 = sphi 0, %s60
      %s77 = sphi 0, %s61
      %s85 = sphi 0, %s87
      %s88 = sphi 0, %s85
      %s89 = sphi 0, %s88
      %s105 = sphi 0, %s89
      %s109 = sphi 0, %s109
      %s111 = sphi 0, %s109
      %s112 = sphi 0, %s111
      %s126 = sphi 0, %s112
      %s130 = sphi 0, %s130
      %s132 = sphi 0, %s130
      %s133 = sphi 0, %s132
      %s147 = sphi 0, %s133
      %s151 = sphi 0, %s151
      %s153 = sphi 0, %s151
      %s154 = sphi 0, %s153
      %s168 = sphi 0, %s154
      %s172 = sphi 0, %s172
      %s174 = sphi 0, %s172
      %s175 = sphi 0, %s174
      %s189 = sphi 0, %s175
      %s193 = sphi 0, %s193
      %s195 = sphi 0, %s193
      %s196 = sphi 0, %s195
      %s210 = sphi 0, %s196
      %s214 = sphi 0, %s214
      %s216 = sphi 0, %s214
      %s217 = sphi 0, %s216
      %s231 = sphi 0, %s217
      %s235 = sphi 0, %s235
      %s237 = sphi 0, %s235
      %s238 = sphi 0, %s237
      %s252 = sphi 0, %s238
      %s256 = sphi 0, %s256
      %s258 = sphi 0, %s256
      %s259 = sphi 0, %s258
      %s273 = sphi 0, %s259
      %s277 = sphi 0, %s277
      %s279 = sphi 0, %s277
      %s280 = sphi 0, %s279
      %s294 = sphi 0, %s280
      %s298 = sphi 0, %s298
      %s300 = sphi 0, %s298
      %s301 = sphi 0, %s300
      %s315 = sphi 0, %s301
      %s319 = sphi 0, %s319
      %s321 = sphi 0, %s319
      %s322 = sphi 0, %s321
      %s336 = sphi 0, %s322
      %s340 = sphi 0, %s340
      %s342 = sphi 0, %s340
      %s343 = sphi 0, %s342
      %s357 = sphi 0, %s343
      %s361 = sphi 0, %s361
      %s363 = sphi 0, %s361
      %s364 = sphi 0, %s363
      %s378 = sphi 0, %s364
      %s382 = sphi 0, %s382
      %s384 = sphi 0, %s382
      %s385 = sphi 0, %s384
      %s399 = sphi 0, %s385
      %s403 = sphi 0, %s403
      %s405 = sphi 0, %s403
      %s406 = sphi 0, %s405
      %s420 = sphi 0, %s406
      %s424 = sphi 0, %s424
      %s426 = sphi 0, %s424
      %s427 = sphi 0, %s426
      %s441 = sphi 0, %s427
      %s447 = sphi 0, %s449
      %s450 = sphi 0, %s447
      %s451 = sphi 0, %s450
      %s467 = sphi 0, %s451
    $region4: #{tpu_custom_call.1} parent=1 // loop_header_branch
      %36 = sbr.rel (%p34) target = $region8
    $region5: #{tpu_custom_call.1} parent=1 // loop_body
      %s38 = ssub.s32 %s33, 1
      %s39 = ssub.s32 %s33, 2
      %s46 = sadd.s32 1, %s41
      %p47 = scmp.ge.s32.totalorder %s46, 1
      %s48 = scalar_select %p47, 0, %s46
      %s49 = sadd.s32 1, %s40
      %s50 = scalar_select %p47, %s49, %s40
      %p51 = scmp.ge.s32.totalorder %s50, 2
      %s52 = scalar_select %p51, 0, %s50
      %s53 = ssub.s32 %s40, %s52
      %s54 = ssub.s32 %s41, %s48
      %s55 = sor.u32 %s53, %s54
      %p56 = scmp.eq.s32.totalorder %s55, 0
      %s58 = sadd.s32 %s57, 1
      %s59 = scalar_select %p56, %s57, %s58
      %p62 = pneg %p56
      %p63 = scmp.eq.s32.totalorder %s33, 1
      %p64 = por %p62, %p63
      %p65 = scmp.ne.s32.totalorder %s57, %s60
      %p66 = scmp.eq.s32.totalorder %s33, 0
      %p67 = por %p65, %p66
      %p68 = scmp.ne.s32.totalorder %s57, %s60
      %p69 = scmp.eq.s32.totalorder %s38, 1
      %p70 = por %p68, %p69
      %p71 = scmp.ne.s32.totalorder %s60, %s61
      %p72 = scmp.eq.s32.totalorder %s38, 0
      %p73 = por %p71, %p72
      %p74 = scmp.ne.s32.totalorder %s60, %s61
      %p75 = scmp.eq.s32.totalorder %s39, 1
      %p76 = por %p74, %p75
      %p78 = scmp.ne.s32.totalorder %s61, %s77
      %p79 = scmp.eq.s32.totalorder %s39, 0
      %p80 = por %p78, %p79
      %s81 = ssub.s32 %s40, %s52
      %s82 = ssub.s32 %s41, %s48
      %s83 = sor.u32 %s81, %s82
      %p84 = scmp.eq.s32.totalorder %s83, 0
      %s86 = sadd.s32 %s85, 1
      %s87 = scalar_select %p84, %s85, %s86
      %p90 = pneg %p84
      %p91 = scmp.eq.s32.totalorder %s33, 1
      %p92 = por %p90, %p91
      %p93 = scmp.ne.s32.totalorder %s85, %s88
      %p94 = scmp.eq.s32.totalorder %s33, 0
      %p95 = por %p93, %p94
      %p96 = scmp.ne.s32.totalorder %s85, %s88
      %p97 = scmp.eq.s32.totalorder %s38, 1
      %p98 = por %p96, %p97
      %p99 = scmp.ne.s32.totalorder %s88, %s89
      %p100 = scmp.eq.s32.totalorder %s38, 0
      %p101 = por %p99, %p100
      %p102 = scmp.ne.s32.totalorder %s88, %s89
      %p103 = scmp.eq.s32.totalorder %s39, 1
      %p104 = por %p102, %p103
      %p106 = scmp.ne.s32.totalorder %s89, %s105
      %p107 = scmp.eq.s32.totalorder %s39, 0
      %p108 = por %p106, %p107
      %s110 = sadd.s32 %s109, 1
      %p113 = scmp.eq.s32.totalorder %s33, 1
      %p114 = scmp.ne.s32.totalorder %s109, %s111
      %p115 = scmp.eq.s32.totalorder %s33, 0
      %p116 = por %p114, %p115
      %p117 = scmp.ne.s32.totalorder %s109, %s111
      %p118 = scmp.eq.s32.totalorder %s38, 1
      %p119 = por %p117, %p118
      %p120 = scmp.ne.s32.totalorder %s111, %s112
      %p121 = scmp.eq.s32.totalorder %s38, 0
      %p122 = por %p120, %p121
      %p123 = scmp.ne.s32.totalorder %s111, %s112
      %p124 = scmp.eq.s32.totalorder %s39, 1
      %p125 = por %p123, %p124
      %p127 = scmp.ne.s32.totalorder %s112, %s126
      %p128 = scmp.eq.s32.totalorder %s39, 0
      %p129 = por %p127, %p128
      %s131 = sadd.s32 %s130, 1
      %p134 = scmp.eq.s32.totalorder %s33, 1
      %p135 = scmp.ne.s32.totalorder %s130, %s132
      %p136 = scmp.eq.s32.totalorder %s33, 0
      %p137 = por %p135, %p136
      %p138 = scmp.ne.s32.totalorder %s130, %s132
      %p139 = scmp.eq.s32.totalorder %s38, 1
      %p140 = por %p138, %p139
      %p141 = scmp.ne.s32.totalorder %s132, %s133
      %p142 = scmp.eq.s32.totalorder %s38, 0
      %p143 = por %p141, %p142
      %p144 = scmp.ne.s32.totalorder %s132, %s133
      %p145 = scmp.eq.s32.totalorder %s39, 1
      %p146 = por %p144, %p145
      %p148 = scmp.ne.s32.totalorder %s133, %s147
      %p149 = scmp.eq.s32.totalorder %s39, 0
      %p150 = por %p148, %p149
      %s152 = sadd.s32 %s151, 1
      %p155 = scmp.eq.s32.totalorder %s33, 1
      %p156 = scmp.ne.s32.totalorder %s151, %s153
      %p157 = scmp.eq.s32.totalorder %s33, 0
      %p158 = por %p156, %p157
      %p159 = scmp.ne.s32.totalorder %s151, %s153
      %p160 = scmp.eq.s32.totalorder %s38, 1
      %p161 = por %p159, %p160
      %p162 = scmp.ne.s32.totalorder %s153, %s154
      %p163 = scmp.eq.s32.totalorder %s38, 0
      %p164 = por %p162, %p163
      %p165 = scmp.ne.s32.totalorder %s153, %s154
      %p166 = scmp.eq.s32.totalorder %s39, 1
      %p167 = por %p165, %p166
      %p169 = scmp.ne.s32.totalorder %s154, %s168
      %p170 = scmp.eq.s32.totalorder %s39, 0
      %p171 = por %p169, %p170
      %s173 = sadd.s32 %s172, 1
      %p176 = scmp.eq.s32.totalorder %s33, 1
      %p177 = scmp.ne.s32.totalorder %s172, %s174
      %p178 = scmp.eq.s32.totalorder %s33, 0
      %p179 = por %p177, %p178
      %p180 = scmp.ne.s32.totalorder %s172, %s174
      %p181 = scmp.eq.s32.totalorder %s38, 1
      %p182 = por %p180, %p181
      %p183 = scmp.ne.s32.totalorder %s174, %s175
      %p184 = scmp.eq.s32.totalorder %s38, 0
      %p185 = por %p183, %p184
      %p186 = scmp.ne.s32.totalorder %s174, %s175
      %p187 = scmp.eq.s32.totalorder %s39, 1
      %p188 = por %p186, %p187
      %p190 = scmp.ne.s32.totalorder %s175, %s189
      %p191 = scmp.eq.s32.totalorder %s39, 0
      %p192 = por %p190, %p191
      %s194 = sadd.s32 %s193, 1
      %p197 = scmp.eq.s32.totalorder %s33, 1
      %p198 = scmp.ne.s32.totalorder %s193, %s195
      %p199 = scmp.eq.s32.totalorder %s33, 0
      %p200 = por %p198, %p199
      %p201 = scmp.ne.s32.totalorder %s193, %s195
      %p202 = scmp.eq.s32.totalorder %s38, 1
      %p203 = por %p201, %p202
      %p204 = scmp.ne.s32.totalorder %s195, %s196
      %p205 = scmp.eq.s32.totalorder %s38, 0
      %p206 = por %p204, %p205
      %p207 = scmp.ne.s32.totalorder %s195, %s196
      %p208 = scmp.eq.s32.totalorder %s39, 1
      %p209 = por %p207, %p208
      %p211 = scmp.ne.s32.totalorder %s196, %s210
      %p212 = scmp.eq.s32.totalorder %s39, 0
      %p213 = por %p211, %p212
      %s215 = sadd.s32 %s214, 1
      %p218 = scmp.eq.s32.totalorder %s33, 1
      %p219 = scmp.ne.s32.totalorder %s214, %s216
      %p220 = scmp.eq.s32.totalorder %s33, 0
      %p221 = por %p219, %p220
      %p222 = scmp.ne.s32.totalorder %s214, %s216
      %p223 = scmp.eq.s32.totalorder %s38, 1
      %p224 = por %p222, %p223
      %p225 = scmp.ne.s32.totalorder %s216, %s217
      %p226 = scmp.eq.s32.totalorder %s38, 0
      %p227 = por %p225, %p226
      %p228 = scmp.ne.s32.totalorder %s216, %s217
      %p229 = scmp.eq.s32.totalorder %s39, 1
      %p230 = por %p228, %p229
      %p232 = scmp.ne.s32.totalorder %s217, %s231
      %p233 = scmp.eq.s32.totalorder %s39, 0
      %p234 = por %p232, %p233
      %s236 = sadd.s32 %s235, 1
      %p239 = scmp.eq.s32.totalorder %s33, 1
      %p240 = scmp.ne.s32.totalorder %s235, %s237
      %p241 = scmp.eq.s32.totalorder %s33, 0
      %p242 = por %p240, %p241
      %p243 = scmp.ne.s32.totalorder %s235, %s237
      %p244 = scmp.eq.s32.totalorder %s38, 1
      %p245 = por %p243, %p244
      %p246 = scmp.ne.s32.totalorder %s237, %s238
      %p247 = scmp.eq.s32.totalorder %s38, 0
      %p248 = por %p246, %p247
      %p249 = scmp.ne.s32.totalorder %s237, %s238
      %p250 = scmp.eq.s32.totalorder %s39, 1
      %p251 = por %p249, %p250
      %p253 = scmp.ne.s32.totalorder %s238, %s252
      %p254 = scmp.eq.s32.totalorder %s39, 0
      %p255 = por %p253, %p254
      %s257 = sadd.s32 %s256, 1
      %p260 = scmp.eq.s32.totalorder %s33, 1
      %p261 = scmp.ne.s32.totalorder %s256, %s258
      %p262 = scmp.eq.s32.totalorder %s33, 0
      %p263 = por %p261, %p262
      %p264 = scmp.ne.s32.totalorder %s256, %s258
      %p265 = scmp.eq.s32.totalorder %s38, 1
      %p266 = por %p264, %p265
      %p267 = scmp.ne.s32.totalorder %s258, %s259
      %p268 = scmp.eq.s32.totalorder %s38, 0
      %p269 = por %p267, %p268
      %p270 = scmp.ne.s32.totalorder %s258, %s259
      %p271 = scmp.eq.s32.totalorder %s39, 1
      %p272 = por %p270, %p271
      %p274 = scmp.ne.s32.totalorder %s259, %s273
      %p275 = scmp.eq.s32.totalorder %s39, 0
      %p276 = por %p274, %p275
      %s278 = sadd.s32 %s277, 1
      %p281 = scmp.eq.s32.totalorder %s33, 1
      %p282 = scmp.ne.s32.totalorder %s277, %s279
      %p283 = scmp.eq.s32.totalorder %s33, 0
      %p284 = por %p282, %p283
      %p285 = scmp.ne.s32.totalorder %s277, %s279
      %p286 = scmp.eq.s32.totalorder %s38, 1
      %p287 = por %p285, %p286
      %p288 = scmp.ne.s32.totalorder %s279, %s280
      %p289 = scmp.eq.s32.totalorder %s38, 0
      %p290 = por %p288, %p289
      %p291 = scmp.ne.s32.totalorder %s279, %s280
      %p292 = scmp.eq.s32.totalorder %s39, 1
      %p293 = por %p291, %p292
      %p295 = scmp.ne.s32.totalorder %s280, %s294
      %p296 = scmp.eq.s32.totalorder %s39, 0
      %p297 = por %p295, %p296
      %s299 = sadd.s32 %s298, 1
      %p302 = scmp.eq.s32.totalorder %s33, 1
      %p303 = scmp.ne.s32.totalorder %s298, %s300
      %p304 = scmp.eq.s32.totalorder %s33, 0
      %p305 = por %p303, %p304
      %p306 = scmp.ne.s32.totalorder %s298, %s300
      %p307 = scmp.eq.s32.totalorder %s38, 1
      %p308 = por %p306, %p307
      %p309 = scmp.ne.s32.totalorder %s300, %s301
      %p310 = scmp.eq.s32.totalorder %s38, 0
      %p311 = por %p309, %p310
      %p312 = scmp.ne.s32.totalorder %s300, %s301
      %p313 = scmp.eq.s32.totalorder %s39, 1
      %p314 = por %p312, %p313
      %p316 = scmp.ne.s32.totalorder %s301, %s315
      %p317 = scmp.eq.s32.totalorder %s39, 0
      %p318 = por %p316, %p317
      %s320 = sadd.s32 %s319, 1
      %p323 = scmp.eq.s32.totalorder %s33, 1
      %p324 = scmp.ne.s32.totalorder %s319, %s321
      %p325 = scmp.eq.s32.totalorder %s33, 0
      %p326 = por %p324, %p325
      %p327 = scmp.ne.s32.totalorder %s319, %s321
      %p328 = scmp.eq.s32.totalorder %s38, 1
      %p329 = por %p327, %p328
      %p330 = scmp.ne.s32.totalorder %s321, %s322
      %p331 = scmp.eq.s32.totalorder %s38, 0
      %p332 = por %p330, %p331
      %p333 = scmp.ne.s32.totalorder %s321, %s322
      %p334 = scmp.eq.s32.totalorder %s39, 1
      %p335 = por %p333, %p334
      %p337 = scmp.ne.s32.totalorder %s322, %s336
      %p338 = scmp.eq.s32.totalorder %s39, 0
      %p339 = por %p337, %p338
      %s341 = sadd.s32 %s340, 1
      %p344 = scmp.eq.s32.totalorder %s33, 1
      %p345 = scmp.ne.s32.totalorder %s340, %s342
      %p346 = scmp.eq.s32.totalorder %s33, 0
      %p347 = por %p345, %p346
      %p348 = scmp.ne.s32.totalorder %s340, %s342
      %p349 = scmp.eq.s32.totalorder %s38, 1
      %p350 = por %p348, %p349
      %p351 = scmp.ne.s32.totalorder %s342, %s343
      %p352 = scmp.eq.s32.totalorder %s38, 0
      %p353 = por %p351, %p352
      %p354 = scmp.ne.s32.totalorder %s342, %s343
      %p355 = scmp.eq.s32.totalorder %s39, 1
      %p356 = por %p354, %p355
      %p358 = scmp.ne.s32.totalorder %s343, %s357
      %p359 = scmp.eq.s32.totalorder %s39, 0
      %p360 = por %p358, %p359
      %s362 = sadd.s32 %s361, 1
      %p365 = scmp.eq.s32.totalorder %s33, 1
      %p366 = scmp.ne.s32.totalorder %s361, %s363
      %p367 = scmp.eq.s32.totalorder %s33, 0
      %p368 = por %p366, %p367
      %p369 = scmp.ne.s32.totalorder %s361, %s363
      %p370 = scmp.eq.s32.totalorder %s38, 1
      %p371 = por %p369, %p370
      %p372 = scmp.ne.s32.totalorder %s363, %s364
      %p373 = scmp.eq.s32.totalorder %s38, 0
      %p374 = por %p372, %p373
      %p375 = scmp.ne.s32.totalorder %s363, %s364
      %p376 = scmp.eq.s32.totalorder %s39, 1
      %p377 = por %p375, %p376
      %p379 = scmp.ne.s32.totalorder %s364, %s378
      %p380 = scmp.eq.s32.totalorder %s39, 0
      %p381 = por %p379, %p380
      %s383 = sadd.s32 %s382, 1
      %p386 = scmp.eq.s32.totalorder %s33, 1
      %p387 = scmp.ne.s32.totalorder %s382, %s384
      %p388 = scmp.eq.s32.totalorder %s33, 0
      %p389 = por %p387, %p388
      %p390 = scmp.ne.s32.totalorder %s382, %s384
      %p391 = scmp.eq.s32.totalorder %s38, 1
      %p392 = por %p390, %p391
      %p393 = scmp.ne.s32.totalorder %s384, %s385
      %p394 = scmp.eq.s32.totalorder %s38, 0
      %p395 = por %p393, %p394
      %p396 = scmp.ne.s32.totalorder %s384, %s385
      %p397 = scmp.eq.s32.totalorder %s39, 1
      %p398 = por %p396, %p397
      %p400 = scmp.ne.s32.totalorder %s385, %s399
      %p401 = scmp.eq.s32.totalorder %s39, 0
      %p402 = por %p400, %p401
      %s404 = sadd.s32 %s403, 1
      %p407 = scmp.eq.s32.totalorder %s33, 1
      %p408 = scmp.ne.s32.totalorder %s403, %s405
      %p409 = scmp.eq.s32.totalorder %s33, 0
      %p410 = por %p408, %p409
      %p411 = scmp.ne.s32.totalorder %s403, %s405
      %p412 = scmp.eq.s32.totalorder %s38, 1
      %p413 = por %p411, %p412
      %p414 = scmp.ne.s32.totalorder %s405, %s406
      %p415 = scmp.eq.s32.totalorder %s38, 0
      %p416 = por %p414, %p415
      %p417 = scmp.ne.s32.totalorder %s405, %s406
      %p418 = scmp.eq.s32.totalorder %s39, 1
      %p419 = por %p417, %p418
      %p421 = scmp.ne.s32.totalorder %s406, %s420
      %p422 = scmp.eq.s32.totalorder %s39, 0
      %p423 = por %p421, %p422
      %s425 = sadd.s32 %s424, 1
      %p428 = scmp.eq.s32.totalorder %s33, 1
      %p429 = scmp.ne.s32.totalorder %s424, %s426
      %p430 = scmp.eq.s32.totalorder %s33, 0
      %p431 = por %p429, %p430
      %p432 = scmp.ne.s32.totalorder %s424, %s426
      %p433 = scmp.eq.s32.totalorder %s38, 1
      %p434 = por %p432, %p433
      %p435 = scmp.ne.s32.totalorder %s426, %s427
      %p436 = scmp.eq.s32.totalorder %s38, 0
      %p437 = por %p435, %p436
      %p438 = scmp.ne.s32.totalorder %s426, %s427
      %p439 = scmp.eq.s32.totalorder %s39, 1
      %p440 = por %p438, %p439
      %p442 = scmp.ne.s32.totalorder %s427, %s441
      %p443 = scmp.eq.s32.totalorder %s39, 0
      %p444 = por %p442, %p443
      %s445 = ssub.s32 %s40, %s52
      %p446 = scmp.eq.s32.totalorder %s445, 0
      %s448 = sadd.s32 %s447, 1
      %s449 = scalar_select %p446, %s447, %s448
      %p452 = pneg %p446
      %p453 = scmp.eq.s32.totalorder %s33, 1
      %p454 = por %p452, %p453
      %p455 = scmp.ne.s32.totalorder %s447, %s450
      %p456 = scmp.eq.s32.totalorder %s33, 0
      %p457 = por %p455, %p456
      %p458 = scmp.ne.s32.totalorder %s447, %s450
      %p459 = scmp.eq.s32.totalorder %s38, 1
      %p460 = por %p458, %p459
      %p461 = scmp.ne.s32.totalorder %s450, %s451
      %p462 = scmp.eq.s32.totalorder %s38, 0
      %p463 = por %p461, %p462
      %p464 = scmp.ne.s32.totalorder %s450, %s451
      %p465 = scmp.eq.s32.totalorder %s39, 1
      %p466 = por %p464, %p465
      %p468 = scmp.ne.s32.totalorder %s451, %s467
      %p469 = scmp.eq.s32.totalorder %s39, 0
      %p470 = por %p468, %p469
      %p471 = scmp.le.s32.totalorder 1, %s33
      %p472 = scmp.lt.s32.totalorder %s33, 3
      %p473 = pnand %p471, %p472
      %p474 = pneg %p473
      // Predicated region
      $region9: #{tpu_custom_call.1} parent=5 // pred_check
        _
      $region10: #{tpu_custom_call.1} parent=5 // pred_check_branch
        %476 = sbr.rel (%p473) target = $region12
      $region11: #{tpu_custom_call.1} parent=5 // pred_region
        %s477 = ssub.s32 %s33, 1
        // Predicated region
        $region13: #{tpu_custom_call.1} parent=11 // pred_check
          %p478 = pneg %p122
        $region14: #{tpu_custom_call.1} parent=11 // pred_check_branch
          %480 = sbr.rel (%p478) target = $region16
        $region15: #{tpu_custom_call.1} parent=11 // pred_region
          %s482 = ssub.s32 256, 256
          %483 = vsyncadd [#allocation7], %s482
          %s484 = sshll.u32 [#allocation6], 4
          %s485 = int_to_ptr.vmem [resolvable:$true] %s484
          %490 = dma.hbm_to_vmem [thread:$0]  %s2, 256, %s485, [#allocation7], 64, 64, 4
        $region16: #{tpu_custom_call.1} parent=11 // pred_fallthru
          _
        // Predicated region
        $region17: #{tpu_custom_call.1} parent=11 // pred_check
          %p491 = pneg %p143
        $region18: #{tpu_custom_call.1} parent=11 // pred_check_branch
          %493 = sbr.rel (%p491) target = $region20
        $region19: #{tpu_custom_call.1} parent=11 // pred_region
          _
        $region20: #{tpu_custom_call.1} parent=11 // pred_fallthru
          _
        // Predicated region
        $region21: #{tpu_custom_call.1} parent=11 // pred_check
          %p494 = pneg %p164
        $region22: #{tpu_custom_call.1} parent=11 // pred_check_branch
          %496 = sbr.rel (%p494) target = $region24
        $region23: #{tpu_custom_call.1} parent=11 // pred_region
          %s498 = ssub.s32 1024, 1024
          %499 = vsyncadd [#allocation7], %s498
          %s500 = sshll.u32 [#allocation8], 4
          %s501 = int_to_ptr.vmem [resolvable:$true] %s500
          %506 = dma.hbm_to_vmem [thread:$0]  %s4, 1024, %s501, [#allocation7], 64, 64, 4
        $region24: #{tpu_custom_call.1} parent=11 // pred_fallthru
          _
        // Predicated region
        $region25: #{tpu_custom_call.1} parent=11 // pred_check
          %p507 = pneg %p185
        $region26: #{tpu_custom_call.1} parent=11 // pred_check_branch
          %509 = sbr.rel (%p507) target = $region28
        $region27: #{tpu_custom_call.1} parent=11 // pred_region
          _
        $region28: #{tpu_custom_call.1} parent=11 // pred_fallthru
          _
        // Predicated region
        $region29: #{tpu_custom_call.1} parent=11 // pred_check
          %p510 = pneg %p206
        $region30: #{tpu_custom_call.1} parent=11 // pred_check_branch
          %512 = sbr.rel (%p510) target = $region32
        $region31: #{tpu_custom_call.1} parent=11 // pred_region
          _
        $region32: #{tpu_custom_call.1} parent=11 // pred_fallthru
          _
        // Predicated region
        $region33: #{tpu_custom_call.1} parent=11 // pred_check
          %p513 = pneg %p227
        $region34: #{tpu_custom_call.1} parent=11 // pred_check_branch
          %515 = sbr.rel (%p513) target = $region36
        $region35: #{tpu_custom_call.1} parent=11 // pred_region
          _
        $region36: #{tpu_custom_call.1} parent=11 // pred_fallthru
          _
        // Predicated region
        $region37: #{tpu_custom_call.1} parent=11 // pred_check
          %p516 = pneg %p248
        $region38: #{tpu_custom_call.1} parent=11 // pred_check_branch
          %518 = sbr.rel (%p516) target = $region40
        $region39: #{tpu_custom_call.1} parent=11 // pred_region
          %s520 = ssub.s32 1024, 1024
          %521 = vsyncadd [#allocation10], %s520
          %s522 = sshll.u32 [#allocation9], 4
          %s523 = int_to_ptr.vmem [resolvable:$true] %s522
          %528 = dma.hbm_to_vmem [thread:$0]  %s8, 1024, %s523, [#allocation10], 64, 64, 4
        $region40: #{tpu_custom_call.1} parent=11 // pred_fallthru
          _
        // Predicated region
        $region41: #{tpu_custom_call.1} parent=11 // pred_check
          %p529 = pneg %p269
        $region42: #{tpu_custom_call.1} parent=11 // pred_check_branch
          %531 = sbr.rel (%p529) target = $region44
        $region43: #{tpu_custom_call.1} parent=11 // pred_region
          _
        $region44: #{tpu_custom_call.1} parent=11 // pred_fallthru
          _
        // Predicated region
        $region45: #{tpu_custom_call.1} parent=11 // pred_check
          %p532 = pneg %p290
        $region46: #{tpu_custom_call.1} parent=11 // pred_check_branch
          %534 = sbr.rel (%p532) target = $region48
        $region47: #{tpu_custom_call.1} parent=11 // pred_region
          %s536 = ssub.s32 1024, 1024
          %537 = vsyncadd [#allocation10], %s536
          %s538 = sshll.u32 [#allocation11], 4
          %s539 = int_to_ptr.vmem [resolvable:$true] %s538
          %544 = dma.hbm_to_vmem [thread:$0]  %s10, 1024, %s539, [#allocation10], 64, 64, 4
        $region48: #{tpu_custom_call.1} parent=11 // pred_fallthru
          _
        // Predicated region
        $region49: #{tpu_custom_call.1} parent=11 // pred_check
          %p545 = pneg %p311
        $region50: #{tpu_custom_call.1} parent=11 // pred_check_branch
          %547 = sbr.rel (%p545) target = $region52
        $region51: #{tpu_custom_call.1} parent=11 // pred_region
          _
        $region52: #{tpu_custom_call.1} parent=11 // pred_fallthru
          _
        // Predicated region
        $region53: #{tpu_custom_call.1} parent=11 // pred_check
          %p548 = pneg %p332
        $region54: #{tpu_custom_call.1} parent=11 // pred_check_branch
          %550 = sbr.rel (%p548) target = $region56
        $region55: #{tpu_custom_call.1} parent=11 // pred_region
          _
        $region56: #{tpu_custom_call.1} parent=11 // pred_fallthru
          _
        // Predicated region
        $region57: #{tpu_custom_call.1} parent=11 // pred_check
          %p551 = pneg %p353
        $region58: #{tpu_custom_call.1} parent=11 // pred_check_branch
          %553 = sbr.rel (%p551) target = $region60
        $region59: #{tpu_custom_call.1} parent=11 // pred_region
          %s555 = ssub.s32 16, 16
          %556 = vsyncadd [#allocation13], %s555
          %s558 = sshll.u32 [#allocation12], 4
          %s559 = int_to_ptr.vmem [resolvable:$true] %s558
          %561 = dma.hbm_to_vmem [thread:$0]  %s13, 16, %s559, [#allocation13]
        $region60: #{tpu_custom_call.1} parent=11 // pred_fallthru
          _
        // Predicated region
        $region61: #{tpu_custom_call.1} parent=11 // pred_check
          %p562 = pneg %p374
        $region62: #{tpu_custom_call.1} parent=11 // pred_check_branch
          %564 = sbr.rel (%p562) target = $region64
        $region63: #{tpu_custom_call.1} parent=11 // pred_region
          _
        $region64: #{tpu_custom_call.1} parent=11 // pred_fallthru
          _
        // Predicated region
        $region65: #{tpu_custom_call.1} parent=11 // pred_check
          %p565 = pneg %p395
        $region66: #{tpu_custom_call.1} parent=11 // pred_check_branch
          %567 = sbr.rel (%p565) target = $region68
        $region67: #{tpu_custom_call.1} parent=11 // pred_region
          _
        $region68: #{tpu_custom_call.1} parent=11 // pred_fallthru
          _
        // Predicated region
        $region69: #{tpu_custom_call.1} parent=11 // pred_check
          %p568 = pneg %p416
        $region70: #{tpu_custom_call.1} parent=11 // pred_check_branch
          %570 = sbr.rel (%p568) target = $region72
        $region71: #{tpu_custom_call.1} parent=11 // pred_region
          %s572 = ssub.s32 1024, 1024
          %573 = vsyncadd [#allocation13], %s572
          %s574 = sshll.u32 [#allocation14], 4
          %s575 = int_to_ptr.vmem [resolvable:$true] %s574
          %580 = dma.hbm_to_vmem [thread:$0]  %s16, 1024, %s575, [#allocation13], 64, 64, 4
        $region72: #{tpu_custom_call.1} parent=11 // pred_fallthru
          _
        // Predicated region
        $region73: #{tpu_custom_call.1} parent=11 // pred_check
          %p581 = pneg %p437
        $region74: #{tpu_custom_call.1} parent=11 // pred_check_branch
          %583 = sbr.rel (%p581) target = $region76
        $region75: #{tpu_custom_call.1} parent=11 // pred_region
          _
        $region76: #{tpu_custom_call.1} parent=11 // pred_fallthru
          _
      $region12: #{tpu_custom_call.1} parent=5 // pred_fallthru
        _
      %p584 = scmp.lt.s32.totalorder %s33, 2
      // Predicated region
      $region77: #{tpu_custom_call.1} parent=5 // pred_check
        %p585 = pneg %p584
      $region78: #{tpu_custom_call.1} parent=5 // pred_check_branch
        %587 = sbr.rel (%p585) target = $region80
      $region79: #{tpu_custom_call.1} parent=5 // pred_region
        // Predicated region
        $region81: #{tpu_custom_call.1} parent=79 // pred_check
          %p588 = pneg %p67
        $region82: #{tpu_custom_call.1} parent=79 // pred_check_branch
          %590 = sbr.rel (%p588) target = $region84
        $region83: #{tpu_custom_call.1} parent=79 // pred_region
          %p591 = scmp.lt.s32.totalorder %s40, 1
          %s592 = scalar_select %p591, %s40, 1
          %p593 = scmp.lt.s32.totalorder %s41, 0
          %s594 = scalar_select %p593, %s41, 0
          %s595 = sadd.s32 %s594, %s592
          %s596 = smul.addr %s595, 8
          %s597 = scalar_lea.vmem %s0, %s596
        $region84: #{tpu_custom_call.1} parent=79 // pred_fallthru
          _
        // Predicated region
        $region85: #{tpu_custom_call.1} parent=79 // pred_check
          %p598 = pneg %p95
        $region86: #{tpu_custom_call.1} parent=79 // pred_check_branch
          %600 = sbr.rel (%p598) target = $region88
        $region87: #{tpu_custom_call.1} parent=79 // pred_region
          %s601 = sand.u32 %s85, 1
          %s602 = scalar_lea.sflag [#allocation4], %s601
          %s603 = sand.u32 %s85, 1
          %s604 = smul.addr %s603, 8
          %s605 = scalar_lea.vmem [#allocation3], %s604
          %s607 = ssub.s32 128, 128
          %608 = vsyncadd %s602, %s607
          %s609 = sadd.s32 %s41, %s40
          %s610 = smul.addr %s609, 128
          %s611 = scalar_lea.hbm %s1, %s610
          %s613 = sshll.u32 %s605, 4
          %s614 = int_to_ptr.vmem [resolvable:$true] %s613
          %616 = dma.hbm_to_vmem [thread:$0]  %s611, 128, %s614, %s602
        $region88: #{tpu_custom_call.1} parent=79 // pred_fallthru
          _
      $region80: #{tpu_custom_call.1} parent=5 // pred_fallthru
        _
      %p617 = scmp.le.s32.totalorder 1, %s33
      %p618 = scmp.lt.s32.totalorder %s33, 3
      %p619 = pnand %p617, %p618
      %p620 = pneg %p619
      // Predicated region
      $region89: #{tpu_custom_call.1} parent=5 // pred_check
        _
      $region90: #{tpu_custom_call.1} parent=5 // pred_check_branch
        %622 = sbr.rel (%p619) target = $region92
      $region91: #{tpu_custom_call.1} parent=5 // pred_region
        %s623 = ssub.s32 %s33, 1
        %s624 = sand.u32 %s88, 1
        %s625 = scalar_lea.sflag [#allocation4], %s624
        %s626 = sand.u32 %s88, 1
        %s627 = smul.addr %s626, 8
        %s628 = scalar_lea.vmem [#allocation3], %s627
        // Predicated region
        $region93: #{tpu_custom_call.1} parent=91 // pred_check
          %p629 = pneg %p101
        $region94: #{tpu_custom_call.1} parent=91 // pred_check_branch
          %631 = sbr.rel (%p629) target = $region96
        $region95: #{tpu_custom_call.1} parent=91 // pred_region
          %632 = dma.done %s625, 128
        $region96: #{tpu_custom_call.1} parent=91 // pred_fallthru
          _
        // Predicated region
        $region97: #{tpu_custom_call.1} parent=91 // pred_check
          %p633 = pneg %p122
        $region98: #{tpu_custom_call.1} parent=91 // pred_check_branch
          %635 = sbr.rel (%p633) target = $region100
        $region99: #{tpu_custom_call.1} parent=91 // pred_region
          %636 = dma.done [#allocation7], 256
        $region100: #{tpu_custom_call.1} parent=91 // pred_fallthru
          _
        // Predicated region
        $region101: #{tpu_custom_call.1} parent=91 // pred_check
          %p637 = pneg %p164
        $region102: #{tpu_custom_call.1} parent=91 // pred_check_branch
          %639 = sbr.rel (%p637) target = $region104
        $region103: #{tpu_custom_call.1} parent=91 // pred_region
          %640 = dma.done [#allocation7], 1024
        $region104: #{tpu_custom_call.1} parent=91 // pred_fallthru
          _
        // Predicated region
        $region105: #{tpu_custom_call.1} parent=91 // pred_check
          %p641 = pneg %p248
        $region106: #{tpu_custom_call.1} parent=91 // pred_check_branch
          %643 = sbr.rel (%p641) target = $region108
        $region107: #{tpu_custom_call.1} parent=91 // pred_region
          %644 = dma.done [#allocation10], 1024
        $region108: #{tpu_custom_call.1} parent=91 // pred_fallthru
          _
        // Predicated region
        $region109: #{tpu_custom_call.1} parent=91 // pred_check
          %p645 = pneg %p290
        $region110: #{tpu_custom_call.1} parent=91 // pred_check_branch
          %647 = sbr.rel (%p645) target = $region112
        $region111: #{tpu_custom_call.1} parent=91 // pred_region
          %648 = dma.done [#allocation10], 1024
        $region112: #{tpu_custom_call.1} parent=91 // pred_fallthru
          _
        // Predicated region
        $region113: #{tpu_custom_call.1} parent=91 // pred_check
          %p649 = pneg %p353
        $region114: #{tpu_custom_call.1} parent=91 // pred_check_branch
          %651 = sbr.rel (%p649) target = $region116
        $region115: #{tpu_custom_call.1} parent=91 // pred_region
          %652 = dma.done [#allocation13], 16
        $region116: #{tpu_custom_call.1} parent=91 // pred_fallthru
          _
        // Predicated region
        $region117: #{tpu_custom_call.1} parent=91 // pred_check
          %p653 = pneg %p416
        $region118: #{tpu_custom_call.1} parent=91 // pred_check_branch
          %655 = sbr.rel (%p653) target = $region120
        $region119: #{tpu_custom_call.1} parent=91 // pred_region
          %656 = dma.done [#allocation13], 1024
        $region120: #{tpu_custom_call.1} parent=91 // pred_fallthru
          _
        %p657 = scmp.lt.s32.totalorder %s42, 1
        %s658 = scalar_select %p657, %s42, 1
        %p659 = scmp.lt.s32.totalorder %s43, 0
        %s660 = scalar_select %p659, %s43, 0
        %s661 = sadd.s32 %s660, %s658
        %s662 = smul.addr %s661, 8
        %s663 = scalar_lea.vmem %s0, %s662
        %p664 = pneg %p73
        %p665 = pneg %p70
        %s666 = sand.u32 %s88, 1
        %s667 = scalar_lea.sflag [#allocation4], %s666
        %s668 = sand.u32 %s88, 1
        %s669 = smul.addr %s668, 8
        %s670 = scalar_lea.vmem [#allocation3], %s669
        %p671 = pneg %p101
        %p672 = pneg %p98
        %p673 = pneg %p122
        %p674 = pneg %p119
        %p675 = pneg %p143
        %p676 = pneg %p140
        %p677 = pneg %p164
        %p678 = pneg %p161
        %p679 = pneg %p185
        %p680 = pneg %p182
        %p681 = pneg %p206
        %p682 = pneg %p203
        %p683 = pneg %p227
        %p684 = pneg %p224
        %p685 = pneg %p248
        %p686 = pneg %p245
        %p687 = pneg %p269
        %p688 = pneg %p266
        %p689 = pneg %p290
        %p690 = pneg %p287
        %p691 = pneg %p311
        %p692 = pneg %p308
        %p693 = pneg %p332
        %p694 = pneg %p329
        %p695 = pneg %p353
        %p696 = pneg %p350
        %p697 = pneg %p374
        %p698 = pneg %p371
        %p699 = pneg %p395
        %p700 = pneg %p392
        %p701 = pneg %p416
        %p702 = pneg %p413
        %p703 = pneg %p437
        %p704 = pneg %p434
        %p705 = pneg %p463
        %p706 = pneg %p460
        %s707 = sand.u32 %s450, 1
        %s708 = scalar_lea.sflag [#allocation5], %s707
        %s709 = sand.u32 %s450, 1
        %s710 = scalar_lea.vmem [#allocation15], %s709
        %p711 = scmp.lt.s32.totalorder %s42, 1
        %s712 = scalar_select %p711, %s42, 1
        %p713 = scmp.lt.s32.totalorder %s43, 0
        %s714 = scalar_select %p713, %s43, 0
        %s715 = sadd.s32 %s714, %s712
        %s716 = smul.addr %s715, 8
        %s717 = scalar_lea.vmem %s0, %s716
        %v719 = vld [vmem:[%s628] sm:$0xff]
        %v720 = vpack.c.bf16 %v719, %v719
        %v721 = vld [vmem:[#allocation6] sm:$0xf]
        %v722 = vld [vmem:[#allocation6 + $0x4] sm:$0xf]
        %v723 = vld [vmem:[#allocation6 + $0x8] sm:$0xf]
        %v724 = vld [vmem:[#allocation6 + $0xc] sm:$0xf]
        %v725 = vld [vmem:[%s3] sm:$0x1]
        %v727 = vlaneseq
        %v728 = vshrl.u32 %v727, 7
        %v729 = vsub.s32 0, %v728
        %v730 = vrot.slane %v725, %v729
        %v736 = vunpack.c.l.b16 %v721
        %v737 = vunpack.c.l.b16 %v722
        %v738 = vunpack.c.l.b16 %v723
        %v739 = vunpack.c.l.b16 %v724
        %v740 = vpack.c.b16 %v737, %v736
        %v741 = vpack.c.b16 %v739, %v738
        %vm744 = vcmask 261120
        %v746 = vsel %vm744, %v720, 0
        %748 = vmatprep.subr.bf16.mxu0 0
        %749 = vmatpush1.bf16.msra.mxu0 %v740
        %750 = vmatprep.subr.bf16.mxu0 0
        %751 = vmatpush1.bf16.msra.mxu0 %v741
        %752 = vmatprep.subr.bf16.mxu0 0
        %753 = vmatpush1.bf16.msra.mxu0 0
        %754 = vmatprep.subr.bf16.mxu0 0
        %755 = vmatpush1.bf16.msra.mxu0 0
        %756 = vmatprep.subr.bf16.mxu0 0
        %757 = vmatpush1.bf16.msra.mxu0 0
        %758 = vmatprep.subr.bf16.mxu0 0
        %759 = vmatpush1.bf16.msra.mxu0 0
        %760 = vmatprep.subr.bf16.mxu0 0
        %761 = vmatpush1.bf16.msra.mxu0 0
        %762 = vmatprep.subr.bf16.mxu0 0
        %763 = vmatpush1.bf16.msra.mxu0 0
        %764 = vmatprep.subr.bf16.mxu0 0
        %765 = vmatpush1.bf16.msra.mxu0 0
        %766 = vmatprep.subr.bf16.mxu0 0
        %767 = vmatpush1.bf16.msra.mxu0 0
        %768 = vmatprep.subr.bf16.mxu0 0
        %769 = vmatpush1.bf16.msra.mxu0 0
        %770 = vmatprep.subr.bf16.mxu0 0
        %771 = vmatpush1.bf16.msra.mxu0 0
        %772 = vmatprep.subr.bf16.mxu0 0
        %773 = vmatpush1.bf16.msra.mxu0 0
        %774 = vmatprep.subr.bf16.mxu0 0
        %775 = vmatpush1.bf16.msra.mxu0 0
        %776 = vmatprep.subr.bf16.mxu0 0
        %777 = vmatpush1.bf16.msra.mxu0 0
        %778 = vmatprep.subr.bf16.mxu0 0
        %779 = vmatpush1.bf16.msra.mxu0 0
        %780 = vmatprep.mubr.bf16.mxu0 0
        %781 = vmatmul.mubr.bf16.gmra.mrb[0].mxu0 %v746
        %v782 = vpop.f32.mrb[0].mxu0
        %v783 = vadd.f32 %v730, %v782
        %v784 = vpop.f32.mrb[0].mxu0
        %v785 = vpop.f32.mrb[0].mxu0
        %v786 = vpop.f32.mrb[0].mxu0
        %787 = vdwg.mxu0
        %vm788 = vcmp.gt.f32.partialorder %v783, 0.0
        %v789 = vmul.f32 %v783, 0.01
        %v790 = vsel %vm788, %v783, %v789
        %v791 = vpack.c.bf16 %v790, %v790
        %v792 = vld [vmem:[#allocation8] sm:$0xf]
        %v793 = vld [vmem:[#allocation8 + $0x4] sm:$0xf]
        %v794 = vld [vmem:[#allocation8 + $0x8] sm:$0xf]
        %v795 = vld [vmem:[#allocation8 + $0xc] sm:$0xf]
        %v796 = vld [vmem:[#allocation8 + $0x10] sm:$0xf]
        %v797 = vld [vmem:[#allocation8 + $0x14] sm:$0xf]
        %v798 = vld [vmem:[#allocation8 + $0x18] sm:$0xf]
        %v799 = vld [vmem:[#allocation8 + $0x1c] sm:$0xf]
        %v800 = vld [vmem:[#allocation8 + $0x20] sm:$0xf]
        %v801 = vld [vmem:[#allocation8 + $0x24] sm:$0xf]
        %v802 = vld [vmem:[#allocation8 + $0x28] sm:$0xf]
        %v803 = vld [vmem:[#allocation8 + $0x2c] sm:$0xf]
        %v804 = vld [vmem:[#allocation8 + $0x30] sm:$0xf]
        %v805 = vld [vmem:[#allocation8 + $0x34] sm:$0xf]
        %v806 = vld [vmem:[#allocation8 + $0x38] sm:$0xf]
        %v807 = vld [vmem:[#allocation8 + $0x3c] sm:$0xf]
        %v808 = vld [vmem:[%s5] sm:$0x1]
        %v810 = vlaneseq
        %v811 = vshrl.u32 %v810, 7
        %v812 = vsub.s32 0, %v811
        %v813 = vrot.slane %v808, %v812
        %v831 = vunpack.c.l.b16 %v792
        %v832 = vunpack.c.l.b16 %v793
        %v833 = vunpack.c.l.b16 %v794
        %v834 = vunpack.c.l.b16 %v795
        %v835 = vunpack.c.l.b16 %v796
        %v836 = vunpack.c.l.b16 %v797
        %v837 = vunpack.c.l.b16 %v798
        %v838 = vunpack.c.l.b16 %v799
        %v839 = vunpack.c.l.b16 %v800
        %v840 = vunpack.c.l.b16 %v801
        %v841 = vunpack.c.l.b16 %v802
        %v842 = vunpack.c.l.b16 %v803
        %v843 = vunpack.c.l.b16 %v804
        %v844 = vunpack.c.l.b16 %v805
        %v845 = vunpack.c.l.b16 %v806
        %v846 = vunpack.c.l.b16 %v807
        %v847 = vpack.c.b16 %v832, %v831
        %v848 = vpack.c.b16 %v834, %v833
        %v849 = vpack.c.b16 %v836, %v835
        %v850 = vpack.c.b16 %v838, %v837
        %v851 = vpack.c.b16 %v840, %v839
        %v852 = vpack.c.b16 %v842, %v841
        %v853 = vpack.c.b16 %v844, %v843
        %v854 = vpack.c.b16 %v846, %v845
        %863 = vmatprep.subr.bf16.mxu0 0
        %864 = vmatpush1.bf16.msra.mxu0 %v847
        %865 = vmatprep.subr.bf16.mxu0 0
        %866 = vmatpush1.bf16.msra.mxu0 %v848
        %867 = vmatprep.subr.bf16.mxu0 0
        %868 = vmatpush1.bf16.msra.mxu0 %v849
        %869 = vmatprep.subr.bf16.mxu0 0
        %870 = vmatpush1.bf16.msra.mxu0 %v850
        %871 = vmatprep.subr.bf16.mxu0 0
        %872 = vmatpush1.bf16.msra.mxu0 %v851
        %873 = vmatprep.subr.bf16.mxu0 0
        %874 = vmatpush1.bf16.msra.mxu0 %v852
        %875 = vmatprep.subr.bf16.mxu0 0
        %876 = vmatpush1.bf16.msra.mxu0 %v853
        %877 = vmatprep.subr.bf16.mxu0 0
        %878 = vmatpush1.bf16.msra.mxu0 %v854
        %879 = vmatprep.subr.bf16.mxu0 0
        %880 = vmatpush1.bf16.msra.mxu0 0
        %881 = vmatprep.subr.bf16.mxu0 0
        %882 = vmatpush1.bf16.msra.mxu0 0
        %883 = vmatprep.subr.bf16.mxu0 0
        %884 = vmatpush1.bf16.msra.mxu0 0
        %885 = vmatprep.subr.bf16.mxu0 0
        %886 = vmatpush1.bf16.msra.mxu0 0
        %887 = vmatprep.subr.bf16.mxu0 0
        %888 = vmatpush1.bf16.msra.mxu0 0
        %889 = vmatprep.subr.bf16.mxu0 0
        %890 = vmatpush1.bf16.msra.mxu0 0
        %891 = vmatprep.subr.bf16.mxu0 0
        %892 = vmatpush1.bf16.msra.mxu0 0
        %893 = vmatprep.subr.bf16.mxu0 0
        %894 = vmatpush1.bf16.msra.mxu0 0
        %895 = vmatprep.mubr.bf16.mxu0 0
        %896 = vmatmul.mubr.bf16.gmra.mrb[0].mxu0 %v791
        %v897 = vpop.f32.mrb[0].mxu0
        %v898 = vadd.f32 %v813, %v897
        %v899 = vpop.f32.mrb[0].mxu0
        %v900 = vpop.f32.mrb[0].mxu0
        %v901 = vpop.f32.mrb[0].mxu0
        %902 = vdwg.mxu0
        %903 = vadd.xlane.f32.xlu0 %v898
        %v904 = vpop.xlane.xlu0 %903
        %v905 = vmul.f32 %v898, %v898
        %906 = vadd.xlane.f32.xlu0 %v905
        %v907 = vpop.xlane.xlu0 %906
        %v908 = vmul.f32 %v904, 0.015625
        %v909 = vmul.f32 %v907, 0.015625
        %v910 = vmul.f32 %v908, %v908
        %v911 = vsub.f32 %v909, %v910
        %v912 = vsub.f32 %v898, %v908
        %v913 = vadd.f32 %v911, 1e-05
        %v914 = vrsqrt.pop %v913
        %v915 = vmul.f32 %v912, %v914
        %v916 = vld [vmem:[%s6] sm:$0x1]
        %v918 = vlaneseq
        %v919 = vshrl.u32 %v918, 7
        %v920 = vsub.s32 0, %v919
        %v921 = vrot.slane %v916, %v920
        %v923 = vmul.f32 %v915, %v921
        %v924 = vld [vmem:[%s7] sm:$0x1]
        %v926 = vlaneseq
        %v927 = vshrl.u32 %v926, 7
        %v928 = vsub.s32 0, %v927
        %v929 = vrot.slane %v924, %v928
        %v931 = vadd.f32 %v923, %v929
        %vm932 = vcmp.gt.f32.partialorder %v931, 0.0
        %v933 = vmul.f32 %v931, 0.01
        %v934 = vsel %vm932, %v931, %v933
        %v935 = vpack.c.bf16 %v934, %v934
        %v936 = vld [vmem:[#allocation9] sm:$0xf]
        %v937 = vld [vmem:[#allocation9 + $0x4] sm:$0xf]
        %v938 = vld [vmem:[#allocation9 + $0x8] sm:$0xf]
        %v939 = vld [vmem:[#allocation9 + $0xc] sm:$0xf]
        %v940 = vld [vmem:[#allocation9 + $0x10] sm:$0xf]
        %v941 = vld [vmem:[#allocation9 + $0x14] sm:$0xf]
        %v942 = vld [vmem:[#allocation9 + $0x18] sm:$0xf]
        %v943 = vld [vmem:[#allocation9 + $0x1c] sm:$0xf]
        %v944 = vld [vmem:[#allocation9 + $0x20] sm:$0xf]
        %v945 = vld [vmem:[#allocation9 + $0x24] sm:$0xf]
        %v946 = vld [vmem:[#allocation9 + $0x28] sm:$0xf]
        %v947 = vld [vmem:[#allocation9 + $0x2c] sm:$0xf]
        %v948 = vld [vmem:[#allocation9 + $0x30] sm:$0xf]
        %v949 = vld [vmem:[#allocation9 + $0x34] sm:$0xf]
        %v950 = vld [vmem:[#allocation9 + $0x38] sm:$0xf]
        %v951 = vld [vmem:[#allocation9 + $0x3c] sm:$0xf]
        %v952 = vld [vmem:[%s9] sm:$0x1]
        %v954 = vlaneseq
        %v955 = vshrl.u32 %v954, 7
        %v956 = vsub.s32 0, %v955
        %v957 = vrot.slane %v952, %v956
        %v975 = vunpack.c.l.b16 %v936
        %v976 = vunpack.c.l.b16 %v937
        %v977 = vunpack.c.l.b16 %v938
        %v978 = vunpack.c.l.b16 %v939
        %v979 = vunpack.c.l.b16 %v940
        %v980 = vunpack.c.l.b16 %v941
        %v981 = vunpack.c.l.b16 %v942
        %v982 = vunpack.c.l.b16 %v943
        %v983 = vunpack.c.l.b16 %v944
        %v984 = vunpack.c.l.b16 %v945
        %v985 = vunpack.c.l.b16 %v946
        %v986 = vunpack.c.l.b16 %v947
        %v987 = vunpack.c.l.b16 %v948
        %v988 = vunpack.c.l.b16 %v949
        %v989 = vunpack.c.l.b16 %v950
        %v990 = vunpack.c.l.b16 %v951
        %v991 = vpack.c.b16 %v976, %v975
        %v992 = vpack.c.b16 %v978, %v977
        %v993 = vpack.c.b16 %v980, %v979
        %v994 = vpack.c.b16 %v982, %v981
        %v995 = vpack.c.b16 %v984, %v983
        %v996 = vpack.c.b16 %v986, %v985
        %v997 = vpack.c.b16 %v988, %v987
        %v998 = vpack.c.b16 %v990, %v989
        %1007 = vmatprep.subr.bf16.mxu0 0
        %1008 = vmatpush1.bf16.msra.mxu0 %v991
        %1009 = vmatprep.subr.bf16.mxu0 0
        %1010 = vmatpush1.bf16.msra.mxu0 %v992
        %1011 = vmatprep.subr.bf16.mxu0 0
        %1012 = vmatpush1.bf16.msra.mxu0 %v993
        %1013 = vmatprep.subr.bf16.mxu0 0
        %1014 = vmatpush1.bf16.msra.mxu0 %v994
        %1015 = vmatprep.subr.bf16.mxu0 0
        %1016 = vmatpush1.bf16.msra.mxu0 %v995
        %1017 = vmatprep.subr.bf16.mxu0 0
        %1018 = vmatpush1.bf16.msra.mxu0 %v996
        %1019 = vmatprep.subr.bf16.mxu0 0
        %1020 = vmatpush1.bf16.msra.mxu0 %v997
        %1021 = vmatprep.subr.bf16.mxu0 0
        %1022 = vmatpush1.bf16.msra.mxu0 %v998
        %1023 = vmatprep.subr.bf16.mxu0 0
        %1024 = vmatpush1.bf16.msra.mxu0 0
        %1025 = vmatprep.subr.bf16.mxu0 0
        %1026 = vmatpush1.bf16.msra.mxu0 0
        %1027 = vmatprep.subr.bf16.mxu0 0
        %1028 = vmatpush1.bf16.msra.mxu0 0
        %1029 = vmatprep.subr.bf16.mxu0 0
        %1030 = vmatpush1.bf16.msra.mxu0 0
        %1031 = vmatprep.subr.bf16.mxu0 0
        %1032 = vmatpush1.bf16.msra.mxu0 0
        %1033 = vmatprep.subr.bf16.mxu0 0
        %1034 = vmatpush1.bf16.msra.mxu0 0
        %1035 = vmatprep.subr.bf16.mxu0 0
        %1036 = vmatpush1.bf16.msra.mxu0 0
        %1037 = vmatprep.subr.bf16.mxu0 0
        %1038 = vmatpush1.bf16.msra.mxu0 0
        %1039 = vmatprep.mubr.bf16.mxu0 0
        %1040 = vmatmul.mubr.bf16.gmra.mrb[0].mxu0 %v935
        %v1041 = vpop.f32.mrb[0].mxu0
        %v1042 = vadd.f32 %v957, %v1041
        %v1043 = vpop.f32.mrb[0].mxu0
        %v1044 = vpop.f32.mrb[0].mxu0
        %v1045 = vpop.f32.mrb[0].mxu0
        %1046 = vdwg.mxu0
        %vm1047 = vcmp.gt.f32.partialorder %v1042, 0.0
        %v1048 = vmul.f32 %v1042, 0.01
        %v1049 = vsel %vm1047, %v1042, %v1048
        %v1050 = vpack.c.bf16 %v1049, %v1049
        %v1051 = vld [vmem:[#allocation11] sm:$0xf]
        %v1052 = vld [vmem:[#allocation11 + $0x4] sm:$0xf]
        %v1053 = vld [vmem:[#allocation11 + $0x8] sm:$0xf]
        %v1054 = vld [vmem:[#allocation11 + $0xc] sm:$0xf]
        %v1055 = vld [vmem:[#allocation11 + $0x10] sm:$0xf]
        %v1056 = vld [vmem:[#allocation11 + $0x14] sm:$0xf]
        %v1057 = vld [vmem:[#allocation11 + $0x18] sm:$0xf]
        %v1058 = vld [vmem:[#allocation11 + $0x1c] sm:$0xf]
        %v1059 = vld [vmem:[#allocation11 + $0x20] sm:$0xf]
        %v1060 = vld [vmem:[#allocation11 + $0x24] sm:$0xf]
        %v1061 = vld [vmem:[#allocation11 + $0x28] sm:$0xf]
        %v1062 = vld [vmem:[#allocation11 + $0x2c] sm:$0xf]
        %v1063 = vld [vmem:[#allocation11 + $0x30] sm:$0xf]
        %v1064 = vld [vmem:[#allocation11 + $0x34] sm:$0xf]
        %v1065 = vld [vmem:[#allocation11 + $0x38] sm:$0xf]
        %v1066 = vld [vmem:[#allocation11 + $0x3c] sm:$0xf]
        %v1067 = vld [vmem:[%s11] sm:$0x1]
        %v1069 = vlaneseq
        %v1070 = vshrl.u32 %v1069, 7
        %v1071 = vsub.s32 0, %v1070
        %v1072 = vrot.slane %v1067, %v1071
        %v1090 = vunpack.c.l.b16 %v1051
        %v1091 = vunpack.c.l.b16 %v1052
        %v1092 = vunpack.c.l.b16 %v1053
        %v1093 = vunpack.c.l.b16 %v1054
        %v1094 = vunpack.c.l.b16 %v1055
        %v1095 = vunpack.c.l.b16 %v1056
        %v1096 = vunpack.c.l.b16 %v1057
        %v1097 = vunpack.c.l.b16 %v1058
        %v1098 = vunpack.c.l.b16 %v1059
        %v1099 = vunpack.c.l.b16 %v1060
        %v1100 = vunpack.c.l.b16 %v1061
        %v1101 = vunpack.c.l.b16 %v1062
        %v1102 = vunpack.c.l.b16 %v1063
        %v1103 = vunpack.c.l.b16 %v1064
        %v1104 = vunpack.c.l.b16 %v1065
        %v1105 = vunpack.c.l.b16 %v1066
        %v1106 = vpack.c.b16 %v1091, %v1090
        %v1107 = vpack.c.b16 %v1093, %v1092
        %v1108 = vpack.c.b16 %v1095, %v1094
        %v1109 = vpack.c.b16 %v1097, %v1096
        %v1110 = vpack.c.b16 %v1099, %v1098
        %v1111 = vpack.c.b16 %v1101, %v1100
        %v1112 = vpack.c.b16 %v1103, %v1102
        %v1113 = vpack.c.b16 %v1105, %v1104
        %1122 = vmatprep.subr.bf16.mxu0 0
        %1123 = vmatpush1.bf16.msra.mxu0 %v1106
        %1124 = vmatprep.subr.bf16.mxu0 0
        %1125 = vmatpush1.bf16.msra.mxu0 %v1107
        %1126 = vmatprep.subr.bf16.mxu0 0
        %1127 = vmatpush1.bf16.msra.mxu0 %v1108
        %1128 = vmatprep.subr.bf16.mxu0 0
        %1129 = vmatpush1.bf16.msra.mxu0 %v1109
        %1130 = vmatprep.subr.bf16.mxu0 0
        %1131 = vmatpush1.bf16.msra.mxu0 %v1110
        %1132 = vmatprep.subr.bf16.mxu0 0
        %1133 = vmatpush1.bf16.msra.mxu0 %v1111
        %1134 = vmatprep.subr.bf16.mxu0 0
        %1135 = vmatpush1.bf16.msra.mxu0 %v1112
        %1136 = vmatprep.subr.bf16.mxu0 0
        %1137 = vmatpush1.bf16.msra.mxu0 %v1113
        %1138 = vmatprep.subr.bf16.mxu0 0
        %1139 = vmatpush1.bf16.msra.mxu0 0
        %1140 = vmatprep.subr.bf16.mxu0 0
        %1141 = vmatpush1.bf16.msra.mxu0 0
        %1142 = vmatprep.subr.bf16.mxu0 0
        %1143 = vmatpush1.bf16.msra.mxu0 0
        %1144 = vmatprep.subr.bf16.mxu0 0
        %1145 = vmatpush1.bf16.msra.mxu0 0
        %1146 = vmatprep.subr.bf16.mxu0 0
        %1147 = vmatpush1.bf16.msra.mxu0 0
        %1148 = vmatprep.subr.bf16.mxu0 0
        %1149 = vmatpush1.bf16.msra.mxu0 0
        %1150 = vmatprep.subr.bf16.mxu0 0
        %1151 = vmatpush1.bf16.msra.mxu0 0
        %1152 = vmatprep.subr.bf16.mxu0 0
        %1153 = vmatpush1.bf16.msra.mxu0 0
        %1154 = vmatprep.mubr.bf16.mxu0 0
        %1155 = vmatmul.mubr.bf16.gmra.mrb[0].mxu0 %v1050
        %v1156 = vpop.f32.mrb[0].mxu0
        %v1157 = vadd.f32 %v1072, %v1156
        %v1158 = vpop.f32.mrb[0].mxu0
        %v1159 = vpop.f32.mrb[0].mxu0
        %v1160 = vpop.f32.mrb[0].mxu0
        %1161 = vdwg.mxu0
        %1162 = vadd.xlane.f32.xlu0 %v1157
        %v1163 = vpop.xlane.xlu0 %1162
        %v1164 = vmul.f32 %v1157, %v1157
        %1165 = vadd.xlane.f32.xlu0 %v1164
        %v1166 = vpop.xlane.xlu0 %1165
        %v1167 = vmul.f32 %v1163, 0.03125
        %v1168 = vmul.f32 %v1166, 0.03125
        %v1169 = vmul.f32 %v1167, %v1167
        %v1170 = vsub.f32 %v1168, %v1169
        %v1171 = vsub.f32 %v1157, %v1167
        %v1172 = vadd.f32 %v1170, 1e-05
        %v1173 = vrsqrt.pop %v1172
        %v1174 = vmul.f32 %v1171, %v1173
        %v1175 = vld [vmem:[%s12] sm:$0x1]
        %v1177 = vlaneseq
        %v1178 = vshrl.u32 %v1177, 7
        %v1179 = vsub.s32 0, %v1178
        %v1180 = vrot.slane %v1175, %v1179
        %v1182 = vmul.f32 %v1174, %v1180
        %v1183 = vld [vmem:[#allocation12] sm:$0x1]
        %v1185 = vlaneseq
        %v1186 = vshrl.u32 %v1185, 7
        %v1187 = vsub.s32 0, %v1186
        %v1188 = vrot.slane %v1183, %v1187
        %v1190 = vadd.f32 %v1182, %v1188
        %vm1191 = vcmp.gt.f32.partialorder %v1190, 0.0
        %v1192 = vmul.f32 %v1190, 0.01
        %v1193 = vsel %vm1191, %v1190, %v1192
        %v1194 = vld [vmem:[%s717] sm:$0xff]
        %vm1195 = vcmp.eq.f32.partialorder %v1194, -inf
        %v1196 = vsel %vm1195, -inf, 0.0
        %1198 = vset.pattern.permute.xlu0 0
        %1199 = vperm.xlu0 %1198, %v1196
        %v1200 = vpop.permute.xlu0 %1199
        %v1202 = vadd.f32 %v1193, %v1200
        %v1203 = vrot.slane %v1202, 4
        %v1204 = vmax.f32 %v1202, %v1203
        %v1205 = vrot.slane %v1204, 2
        %v1206 = vmax.f32 %v1204, %v1205
        %v1207 = vrot.slane %v1206, 1
        %v1208 = vmax.f32 %v1206, %v1207
        %p1209 = scmp.eq.s32.totalorder %s43, 0
        // Predicated region
        $region121: #{tpu_custom_call.1} parent=91 // pred_check
          %p1210 = pneg %p1209
        $region122: #{tpu_custom_call.1} parent=91 // pred_check_branch
          %1212 = sbr.rel (%p1210) target = $region124
        $region123: #{tpu_custom_call.1} parent=91 // pred_region
          %1213 = vst [vmem:[#allocation2] sm:$0x1] -inf
        $region124: #{tpu_custom_call.1} parent=91 // pred_fallthru
          _
        %v1214 = vld [vmem:[#allocation2] sm:$0x1]
        %v1215 = vmax.f32 %v1214, %v1208
        %1216 = vst [vmem:[#allocation2] sm:$0x1] %v1215
        // Predicated region
        $region125: #{tpu_custom_call.1} parent=91 // pred_check
          %p1217 = pneg %p1209
        $region126: #{tpu_custom_call.1} parent=91 // pred_check_branch
          %1219 = sbr.rel (%p1217) target = $region128
        $region127: #{tpu_custom_call.1} parent=91 // pred_region
          %v1220 = vld [vmem:[#allocation2] sm:$0x1]
          %v1221 = vpack.c.bf16 %v1220, %v1220
          %v1222 = vld [vmem:[%s14] sm:$0xf]
          %v1223 = vld [vmem:[%s14 + $0x4] sm:$0xf]
          %v1224 = vld [vmem:[%s14 + $0x8] sm:$0xf]
          %v1225 = vld [vmem:[%s14 + $0xc] sm:$0xf]
          %v1226 = vld [vmem:[%s14 + $0x10] sm:$0xf]
          %v1227 = vld [vmem:[%s14 + $0x14] sm:$0xf]
          %v1228 = vld [vmem:[%s14 + $0x18] sm:$0xf]
          %v1229 = vld [vmem:[%s14 + $0x1c] sm:$0xf]
          %v1230 = vld [vmem:[%s14 + $0x20] sm:$0xf]
          %v1231 = vld [vmem:[%s14 + $0x24] sm:$0xf]
          %v1232 = vld [vmem:[%s14 + $0x28] sm:$0xf]
          %v1233 = vld [vmem:[%s14 + $0x2c] sm:$0xf]
          %v1234 = vld [vmem:[%s14 + $0x30] sm:$0xf]
          %v1235 = vld [vmem:[%s14 + $0x34] sm:$0xf]
          %v1236 = vld [vmem:[%s14 + $0x38] sm:$0xf]
          %v1237 = vld [vmem:[%s14 + $0x3c] sm:$0xf]
          %v1238 = vld [vmem:[%s15] sm:$0x1]
          %v1255 = vunpack.c.l.b16 %v1222
          %v1256 = vunpack.c.l.b16 %v1223
          %v1257 = vunpack.c.l.b16 %v1224
          %v1258 = vunpack.c.l.b16 %v1225
          %v1259 = vunpack.c.l.b16 %v1226
          %v1260 = vunpack.c.l.b16 %v1227
          %v1261 = vunpack.c.l.b16 %v1228
          %v1262 = vunpack.c.l.b16 %v1229
          %v1263 = vunpack.c.l.b16 %v1230
          %v1264 = vunpack.c.l.b16 %v1231
          %v1265 = vunpack.c.l.b16 %v1232
          %v1266 = vunpack.c.l.b16 %v1233
          %v1267 = vunpack.c.l.b16 %v1234
          %v1268 = vunpack.c.l.b16 %v1235
          %v1269 = vunpack.c.l.b16 %v1236
          %v1270 = vunpack.c.l.b16 %v1237
          %v1271 = vpack.c.b16 %v1256, %v1255
          %v1272 = vpack.c.b16 %v1258, %v1257
          %v1273 = vpack.c.b16 %v1260, %v1259
          %v1274 = vpack.c.b16 %v1262, %v1261
          %v1275 = vpack.c.b16 %v1264, %v1263
          %v1276 = vpack.c.b16 %v1266, %v1265
          %v1277 = vpack.c.b16 %v1268, %v1267
          %v1278 = vpack.c.b16 %v1270, %v1269
          %1287 = vmatprep.subr.bf16.mxu0 0
          %1288 = vmatpush1.bf16.msra.mxu0 %v1271
          %1289 = vmatprep.subr.bf16.mxu0 0
          %1290 = vmatpush1.bf16.msra.mxu0 %v1272
          %1291 = vmatprep.subr.bf16.mxu0 0
          %1292 = vmatpush1.bf16.msra.mxu0 %v1273
          %1293 = vmatprep.subr.bf16.mxu0 0
          %1294 = vmatpush1.bf16.msra.mxu0 %v1274
          %1295 = vmatprep.subr.bf16.mxu0 0
          %1296 = vmatpush1.bf16.msra.mxu0 %v1275
          %1297 = vmatprep.subr.bf16.mxu0 0
          %1298 = vmatpush1.bf16.msra.mxu0 %v1276
          %1299 = vmatprep.subr.bf16.mxu0 0
          %1300 = vmatpush1.bf16.msra.mxu0 %v1277
          %1301 = vmatprep.subr.bf16.mxu0 0
          %1302 = vmatpush1.bf16.msra.mxu0 %v1278
          %1303 = vmatprep.subr.bf16.mxu0 0
          %1304 = vmatpush1.bf16.msra.mxu0 0
          %1305 = vmatprep.subr.bf16.mxu0 0
          %1306 = vmatpush1.bf16.msra.mxu0 0
          %1307 = vmatprep.subr.bf16.mxu0 0
          %1308 = vmatpush1.bf16.msra.mxu0 0
          %1309 = vmatprep.subr.bf16.mxu0 0
          %1310 = vmatpush1.bf16.msra.mxu0 0
          %1311 = vmatprep.subr.bf16.mxu0 0
          %1312 = vmatpush1.bf16.msra.mxu0 0
          %1313 = vmatprep.subr.bf16.mxu0 0
          %1314 = vmatpush1.bf16.msra.mxu0 0
          %1315 = vmatprep.subr.bf16.mxu0 0
          %1316 = vmatpush1.bf16.msra.mxu0 0
          %1317 = vmatprep.subr.bf16.mxu0 0
          %1318 = vmatpush1.bf16.msra.mxu0 0
          %1319 = vmatprep.mubr.bf16.mxu0 0
          %1320 = vmatmul.mubr.bf16.gmra.mrb[0].mxu0 %v1221
          %v1321 = vpop.f32.mrb[0].mxu0
          %v1322 = vadd.f32 %v1238, %v1321
          %v1323 = vpop.f32.mrb[0].mxu0
          %v1324 = vpop.f32.mrb[0].mxu0
          %v1325 = vpop.f32.mrb[0].mxu0
          %1326 = vdwg.mxu0
          %vm1327 = vcmp.gt.f32.partialorder %v1322, 0.0
          %v1328 = vmul.f32 %v1322, 0.01
          %v1329 = vsel %vm1327, %v1322, %v1328
          %v1330 = vpack.c.bf16 %v1329, %v1329
          %v1331 = vld [vmem:[#allocation14] sm:$0xf]
          %v1332 = vld [vmem:[#allocation14 + $0x4] sm:$0xf]
          %v1333 = vld [vmem:[#allocation14 + $0x8] sm:$0xf]
          %v1334 = vld [vmem:[#allocation14 + $0xc] sm:$0xf]
          %v1335 = vld [vmem:[#allocation14 + $0x10] sm:$0xf]
          %v1336 = vld [vmem:[#allocation14 + $0x14] sm:$0xf]
          %v1337 = vld [vmem:[#allocation14 + $0x18] sm:$0xf]
          %v1338 = vld [vmem:[#allocation14 + $0x1c] sm:$0xf]
          %v1339 = vld [vmem:[#allocation14 + $0x20] sm:$0xf]
          %v1340 = vld [vmem:[#allocation14 + $0x24] sm:$0xf]
          %v1341 = vld [vmem:[#allocation14 + $0x28] sm:$0xf]
          %v1342 = vld [vmem:[#allocation14 + $0x2c] sm:$0xf]
          %v1343 = vld [vmem:[#allocation14 + $0x30] sm:$0xf]
          %v1344 = vld [vmem:[#allocation14 + $0x34] sm:$0xf]
          %v1345 = vld [vmem:[#allocation14 + $0x38] sm:$0xf]
          %v1346 = vld [vmem:[#allocation14 + $0x3c] sm:$0xf]
          %v1347 = vld [vmem:[%s17] sm:$0x1]
          %v1364 = vunpack.c.l.b16 %v1331
          %v1365 = vunpack.c.l.b16 %v1332
          %v1366 = vunpack.c.l.b16 %v1333
          %v1367 = vunpack.c.l.b16 %v1334
          %v1368 = vunpack.c.l.b16 %v1335
          %v1369 = vunpack.c.l.b16 %v1336
          %v1370 = vunpack.c.l.b16 %v1337
          %v1371 = vunpack.c.l.b16 %v1338
          %v1372 = vunpack.c.l.b16 %v1339
          %v1373 = vunpack.c.l.b16 %v1340
          %v1374 = vunpack.c.l.b16 %v1341
          %v1375 = vunpack.c.l.b16 %v1342
          %v1376 = vunpack.c.l.b16 %v1343
          %v1377 = vunpack.c.l.b16 %v1344
          %v1378 = vunpack.c.l.b16 %v1345
          %v1379 = vunpack.c.l.b16 %v1346
          %v1380 = vpack.c.b16 %v1365, %v1364
          %v1381 = vpack.c.b16 %v1367, %v1366
          %v1382 = vpack.c.b16 %v1369, %v1368
          %v1383 = vpack.c.b16 %v1371, %v1370
          %v1384 = vpack.c.b16 %v1373, %v1372
          %v1385 = vpack.c.b16 %v1375, %v1374
          %v1386 = vpack.c.b16 %v1377, %v1376
          %v1387 = vpack.c.b16 %v1379, %v1378
          %1396 = vmatprep.subr.bf16.mxu0 0
          %1397 = vmatpush1.bf16.msra.mxu0 %v1380
          %1398 = vmatprep.subr.bf16.mxu0 0
          %1399 = vmatpush1.bf16.msra.mxu0 %v1381
          %1400 = vmatprep.subr.bf16.mxu0 0
          %1401 = vmatpush1.bf16.msra.mxu0 %v1382
          %1402 = vmatprep.subr.bf16.mxu0 0
          %1403 = vmatpush1.bf16.msra.mxu0 %v1383
          %1404 = vmatprep.subr.bf16.mxu0 0
          %1405 = vmatpush1.bf16.msra.mxu0 %v1384
          %1406 = vmatprep.subr.bf16.mxu0 0
          %1407 = vmatpush1.bf16.msra.mxu0 %v1385
          %1408 = vmatprep.subr.bf16.mxu0 0
          %1409 = vmatpush1.bf16.msra.mxu0 %v1386
          %1410 = vmatprep.subr.bf16.mxu0 0
          %1411 = vmatpush1.bf16.msra.mxu0 %v1387
          %1412 = vmatprep.subr.bf16.mxu0 0
          %1413 = vmatpush1.bf16.msra.mxu0 0
          %1414 = vmatprep.subr.bf16.mxu0 0
          %1415 = vmatpush1.bf16.msra.mxu0 0
          %1416 = vmatprep.subr.bf16.mxu0 0
          %1417 = vmatpush1.bf16.msra.mxu0 0
          %1418 = vmatprep.subr.bf16.mxu0 0
          %1419 = vmatpush1.bf16.msra.mxu0 0
          %1420 = vmatprep.subr.bf16.mxu0 0
          %1421 = vmatpush1.bf16.msra.mxu0 0
          %1422 = vmatprep.subr.bf16.mxu0 0
          %1423 = vmatpush1.bf16.msra.mxu0 0
          %1424 = vmatprep.subr.bf16.mxu0 0
          %1425 = vmatpush1.bf16.msra.mxu0 0
          %1426 = vmatprep.subr.bf16.mxu0 0
          %1427 = vmatpush1.bf16.msra.mxu0 0
          %1428 = vmatprep.mubr.bf16.mxu0 0
          %1429 = vmatmul.mubr.bf16.gmra.mrb[0].mxu0 %v1330
          %v1430 = vpop.f32.mrb[0].mxu0
          %v1431 = vadd.f32 %v1347, %v1430
          %v1432 = vpop.f32.mrb[0].mxu0
          %v1433 = vpop.f32.mrb[0].mxu0
          %v1434 = vpop.f32.mrb[0].mxu0
          %1435 = vdwg.mxu0
          %vm1436 = vcmp.gt.f32.partialorder %v1431, 0.0
          %v1437 = vmul.f32 %v1431, 0.01
          %v1438 = vsel %vm1436, %v1431, %v1437
          %1439 = vst [vmem:[%s710] sm:$0x1] %v1438
        $region128: #{tpu_custom_call.1} parent=91 // pred_fallthru
          _
        %s1440 = sand.u32 %s450, 1
        %s1441 = scalar_lea.sflag [#allocation5], %s1440
        %s1442 = sand.u32 %s450, 1
        %s1443 = scalar_lea.vmem [#allocation15], %s1442
        // Predicated region
        $region129: #{tpu_custom_call.1} parent=91 // pred_check
          %p1444 = pneg %p460
        $region130: #{tpu_custom_call.1} parent=91 // pred_check_branch
          %1446 = sbr.rel (%p1444) target = $region132
        $region131: #{tpu_custom_call.1} parent=91 // pred_region
          %s1448 = ssub.s32 16, 16
          %1449 = vsyncadd %s1441, %s1448
          %s1450 = smul.addr %s42, 16
          %s1451 = scalar_lea.hbm %s18, %s1450
          %s1453 = sshll.u32 %s1443, 4
          %s1454 = int_to_ptr.vmem [resolvable:$true] %s1453
          %1456 = dma.vmem_to_hbm [thread:$0]  %s1454, 16, %s1451, %s1441
        $region132: #{tpu_custom_call.1} parent=91 // pred_fallthru
          _
      $region92: #{tpu_custom_call.1} parent=5 // pred_fallthru
        _
      %p1457 = scmp.le.s32.totalorder 2, %s33
      // Predicated region
      $region133: #{tpu_custom_call.1} parent=5 // pred_check
        %p1458 = pneg %p1457
      $region134: #{tpu_custom_call.1} parent=5 // pred_check_branch
        %1460 = sbr.rel (%p1458) target = $region136
      $region135: #{tpu_custom_call.1} parent=5 // pred_region
        %s1461 = ssub.s32 %s33, 2
        // Predicated region
        $region137: #{tpu_custom_call.1} parent=135 // pred_check
          %p1462 = pneg %p466
        $region138: #{tpu_custom_call.1} parent=135 // pred_check_branch
          %1464 = sbr.rel (%p1462) target = $region140
        $region139: #{tpu_custom_call.1} parent=135 // pred_region
          %s1465 = sand.u32 %s451, 1
          %s1466 = scalar_lea.sflag [#allocation5], %s1465
          %s1467 = sand.u32 %s451, 1
          %s1468 = scalar_lea.vmem [#allocation15], %s1467
          %1469 = dma.done %s1466, 16
        $region140: #{tpu_custom_call.1} parent=135 // pred_fallthru
          _
      $region136: #{tpu_custom_call.1} parent=5 // pred_fallthru
        _
    $region6: #{tpu_custom_call.1} parent=1 // loop_footer
      %s37 = sadd.s32 1, %s33
    $region7: #{tpu_custom_call.1} parent=1 // loop_footer_branch
      %32 = sbr.rel target = $region3
    $region8: #{tpu_custom_call.1} parent=1 // loop_exit
      _
    %1470 = vsyncpa [#allocation4], 1
    %s1471 = scalar_lea.sflag [#allocation4], 1
    %1472 = vsyncpa %s1471, 1
    %1473 = vsyncpa [#allocation7], 1
    %1474 = vsyncpa [#allocation10], 1
    %1475 = vsyncpa [#allocation13], 1
    %1476 = vsyncpa [#allocation5], 1
    %s1477 = scalar_lea.sflag [#allocation5], 1
    %1478 = vsyncpa %s1477, 1

</llo_original>
